<compile_context>
chip_gen: v6e
topology: v6e:2x2x1
jax: 0.10.0
libtpu: 0.0.40
codegen_flags: <defaults>
</compile_context>

<pallas_src>
import functools

import jax
import jax.numpy as jnp
from jax.experimental import pallas as pl
from jax.experimental.pallas import tpu as pltpu

# ---------------- configuration (mirrors SpikeNet.__init__ defaults) ----------------
IN_FEATURES = 16        # in_features
HID = 32                # hids=[32]  (single aggregator / single SNN layer)
OUT_FEATURES = 8        # out_features
SIZES = (5, 2)          # sizes
P = 0.5                 # p   (fraction sampled from the static vs. evolving graph)
ALPHA = 1.0             # alpha -> GAT leaky-relu negative slope (fast path requires 1.0)
TAU = 1.0               # LIF tau
V_THRESH = 1.0          # LIF firing threshold
T = 2                   # len(data): number of temporal graph snapshots
NUM_GRAPH_NODES = 64    # total nodes in each snapshot
N_QUERY = 8             # number of query nodes (the `nodes` batch)
ATTEN_K = 0             # self.k (atten=0 default)


def _level_layout(n0):
    """Static per-snapshot row layout of the gathered slab (neighbour rows only).

    Returns (level_cfg, rows_per_snapshot, rows_out) where
    level_cfg[j] = (nbr_off, n_self, size): neighbour slab k of hop level j occupies rows
    [nbr_off + k*n_self, nbr_off + (k+1)*n_self) of that snapshot's slab.
    """
    cfg = []
    off = 0
    n_self = n0
    for size in SIZES:
        cfg.append((off, n_self, size))
        off += n_self * size
        n_self *= size
    rows_out = sum(c[1] for c in cfg)
    return tuple(cfg), off, rows_out


# ================================ fused Pallas kernel ================================

def _spikenet_fused_kernel(idx_ref, feat_ref, w_ext_ref, pool_w_ref, pool_b_ref,
                           out_ref, proj_ref,
                           *, level_cfg, rows_per_t, n_steps, hid, tau, v_thresh):
    """Single invocation == the whole forward pass (all T snapshots).

    idx_ref    : [T*R, 1] int32  stacked gather indices into the [T*N] feature table
    feat_ref   : [T*N, D] f32    stacked node features of all snapshots
    w_ext_ref  : [D, H+1] f32    [W | W @ a_dst^T]  (attention folded into the projection)
    pool_w_ref : [T*H, O] f32    pooling weight
    pool_b_ref : [1, O]   f32    pooling bias
    out_ref    : [rows_out, O]   pooled output
    proj_ref   : [T*R, H+1] f32  VMEM scratch holding the projection (reloaded per slab)
    """
    total_rows = n_steps * rows_per_t
    n_nodes_total = feat_ref.shape[0]
    rows_out, out_feats = out_ref.shape

    # ---- one-hot gather matrix built in-kernel (VPU compares, no HBM one-hot operand) ----
    lane = jax.lax.broadcasted_iota(jnp.int32, (total_rows, n_nodes_total), 1)
    onehot = (lane == idx_ref[...]).astype(jnp.float32)                       # [T*R, T*N]

    # ---- ONE gather matmul + ONE projection matmul covering both snapshots ----
    x_rows = jnp.dot(onehot, feat_ref[...], preferred_element_type=jnp.float32)       # [T*R, D]
    proj_ref[...] = jnp.dot(x_rows, w_ext_ref[...], preferred_element_type=jnp.float32)
    # proj columns [:hid] = W x (neighbour features), column [hid] = e_dst logit.

    v = jnp.zeros((rows_out, hid), jnp.float32)          # LIF membrane state (registers)
    pooled = jnp.zeros((rows_out, out_feats), jnp.float32)

    for t in range(n_steps):                             # static unroll over time steps
        base = t * rows_per_t
        agg_parts = []
        for (nbr_off, n_self, s) in level_cfg:           # hop levels processed sequentially
            off = base + nbr_off
            slabs = [proj_ref[off + k * n_self: off + (k + 1) * n_self, :]
                     for k in range(s)]                  # s x [n_self, H+1] reloads
            # alpha == 1.0: leaky-ReLU is identity and the per-row e_src constant cancels in
            # the softmax, so only the neighbours' e_dst logits matter (asserted in wrapper).
            logits = [sl[:, hid:hid + 1] for sl in slabs]
            m = logits[0]
            for k in range(1, s):
                m = jnp.maximum(m, logits[k])
            p = [jnp.exp(l - m) for l in logits]
            z = p[0]
            for k in range(1, s):
                z = z + p[k]
            acc = p[0] * slabs[0][:, :hid]
            for k in range(1, s):
                acc = acc + p[k] * slabs[k][:, :hid]
            agg_parts.append(acc / z)                    # exact divide (no approx reciprocal)
        agg = jnp.concatenate(agg_parts, axis=0)         # [rows_out, H]

        # ---- LIF neuron: v <- v + (x - v)/tau ; spike = H(v - thr) ; hard reset ----
        v = v + (agg - v) * (1.0 / tau)
        spike = (v >= v_thresh).astype(jnp.float32)
        v = v * (1.0 - spike)
        # TODO(synk): surrogate='triangle' only affects the backward pass; forward is Heaviside.
        # TODO(synk): nn.Dropout(0.7) is identity in eval mode; training-mode dropout omitted.

        # ---- pooling contribution of this step: spikes_t @ pool_w[t*H:(t+1)*H] ----
        pooled = pooled + jnp.dot(spike, pool_w_ref[t * hid:(t + 1) * hid, :],
                                  preferred_element_type=jnp.float32)

    out_ref[...] = pooled + pool_b_ref[...]


# ================================ JAX glue (all under jit) ================================

def _sampler(nbr, size, t):
    """Deterministic stand-in for Sampler(add_selfloops(adj)) — hash-based neighbours."""
    # TODO(synk): the real graph samplers (sage/rw) are data-dependent host code with no
    # Pallas equivalent; replaced by a deterministic hash so the kernel path is exercised.
    k = jnp.arange(size, dtype=jnp.int32)[None, :]
    return (nbr[:, None] * 13 + k * 7 + t * 3 + 1) % NUM_GRAPH_NODES


def _sampler_t(nbr, size, t):
    """Deterministic stand-in for the evolving-graph sampler."""
    k = jnp.arange(size, dtype=jnp.int32)[None, :]
    return (nbr[:, None] * 17 + k * 5 + t * 11 + 2) % NUM_GRAPH_NODES


def _sample_hop(cur, size, t):
    """Neighbour matrix [len(cur), size] for one hop (mirrors the torch sampling logic)."""
    size_1 = max(int(size * P), 1)
    size_2 = size - size_1
    nbr_1 = _sampler(cur, size_1, t)
    if size_2 > 0:
        nbr_2 = _sampler_t(cur, size_2, t)
        return jnp.concatenate([nbr_1, nbr_2], axis=1)
    return nbr_1
    # TODO(synk): x[nbr_1]/x[nbr_2] in-place rescaling is a multiply by 1.0 for atten=0 -> skipped.


def _gather_indices(nodes, t):
    """Neighbour-only gather indices for snapshot t, matching _level_layout's row order."""
    segs = []
    cur = nodes
    for size in SIZES:
        nbr_mat = _sample_hop(cur, size, t)        # [n, size] node-major
        segs.append(nbr_mat.T.reshape(-1))         # neighbour-major slabs for this level
        cur = nbr_mat.reshape(-1)                  # node-major -> next level's self nodes
    return jnp.concatenate(segs, axis=0)


def init_params(key):
    k_w, k_as, k_ad, k_pw, k_pb = jax.random.split(key, 5)
    return dict(
        w=jax.random.normal(k_w, (IN_FEATURES, HID), jnp.float32) * 0.2,
        a_src=jax.random.normal(k_as, (1, HID), jnp.float32) * 0.2,
        a_dst=jax.random.normal(k_ad, (1, HID), jnp.float32) * 0.2,
        pool_w=jax.random.normal(k_pw, (T * HID, OUT_FEATURES), jnp.float32) * 0.1,
        pool_b=jax.random.normal(k_pb, (1, OUT_FEATURES), jnp.float32) * 0.1,
    )


@jax.jit
def spikenet_forward(params, features, nodes):
    """features: [T, NUM_GRAPH_NODES, IN_FEATURES] f32; nodes: [N_QUERY] int32."""
    # The kernel elides e_src and the leaky-ReLU; that is only valid when alpha == 1.0 exactly.
    assert ALPHA == 1.0, "Pallas fast path requires alpha == 1.0 (e_src/leaky-ReLU elided)"

    n0 = nodes.shape[0]
    level_cfg, rows_per_t, rows_out = _level_layout(n0)
    total_rows = T * rows_per_t

    # Stacked gather indices into the [T*N] feature table; the one-hot is built IN-KERNEL.
    idx = jnp.concatenate(
        [_gather_indices(nodes, t) + t * NUM_GRAPH_NODES for t in range(T)], axis=0)
    idx = idx.astype(jnp.int32).reshape(total_rows, 1)

    feat = features.reshape(T * NUM_GRAPH_NODES, IN_FEATURES)

    # Fold the destination-attention vector into the projection: w_ext = [W | W @ a_dst^T].
    w_ext = jnp.concatenate([params["w"], params["w"] @ params["a_dst"].T], axis=1)

    kernel = functools.partial(
        _spikenet_fused_kernel, level_cfg=level_cfg, rows_per_t=rows_per_t,
        n_steps=T, hid=HID, tau=TAU, v_thresh=V_THRESH)

    vmem = pl.BlockSpec(memory_space=pltpu.MemorySpace.VMEM)
    return pl.pallas_call(
        kernel,
        out_shape=jax.ShapeDtypeStruct((rows_out, OUT_FEATURES), jnp.float32),
        in_specs=[vmem, vmem, vmem, vmem, vmem],
        out_specs=vmem,
        scratch_shapes=[pltpu.VMEM((total_rows, HID + 1), jnp.float32)],
    )(idx, feat, w_ext, params["pool_w"], params["pool_b"])


# ---------------- pure-JAX reference (no Pallas) for correctness validation ----------------

def reference_forward(params, features, nodes):
    n0 = nodes.shape[0]
    rows_out = n0 * (1 + SIZES[0])
    v = jnp.zeros((rows_out, HID), jnp.float32)
    spikes_list = []
    for t in range(T):
        x = features[t]
        h = [jnp.take(x, nodes, axis=0)]
        cur = nodes
        for size in SIZES:
            nbr_mat = _sample_hop(cur, size, t)
            cur = nbr_mat.reshape(-1)
            h.append(jnp.take(x, cur, axis=0))
        levels = []
        for j in range(len(SIZES)):
            self_x = h[j]
            neigh = h[j + 1].reshape(-1, SIZES[j], IN_FEATURES)
            sh = self_x @ params["w"]                                        # [n, H]
            nh = jnp.einsum("nsd,dh->nsh", neigh, params["w"])               # [n, s, H]
            e_src = jnp.sum(sh * params["a_src"], axis=-1, keepdims=True)    # [n, 1]
            e_dst = jnp.sum(nh * params["a_dst"][None, :, :], axis=-1)       # [n, s]
            e = e_src + e_dst
            e = jnp.where(e >= 0, e, ALPHA * e)
            a = jax.nn.softmax(e, axis=-1)
            levels.append(jnp.einsum("ns,nsh->nh", a, nh))
        agg = jnp.concatenate(levels, axis=0)
        v = v + (agg - v) / TAU
        spike = (v >= V_THRESH).astype(jnp.float32)
        v = v * (1.0 - spike)
        spikes_list.append(spike)
    spikes = jnp.concatenate(spikes_list, axis=1)
    return spikes @ params["pool_w"] + params["pool_b"]


if __name__ == "__main__":
    key = jax.random.PRNGKey(0)
    k_feat, k_nodes, k_params = jax.random.split(key, 3)

    features = jax.random.normal(k_feat, (T, NUM_GRAPH_NODES, IN_FEATURES), jnp.float32)
    nodes = jax.random.randint(k_nodes, (N_QUERY,), 0, NUM_GRAPH_NODES, dtype=jnp.int32)
    params = init_params(k_params)

    out = jax.block_until_ready(spikenet_forward(params, features, nodes))

    rows_out = N_QUERY * (1 + SIZES[0])
    assert out.shape == (rows_out, OUT_FEATURES), out.shape
    assert bool(jnp.all(jnp.isfinite(out)))

    # Validate against the pure-JAX reference.  The softmax now uses an exact divide, so the
    # only residual divergence source is XLA-vs-Mosaic f32 matmul rounding, which can (rarely)
    # flip a near-threshold binary spike and perturb one output row; require >= 90% of
    # elements to match tightly (non-flipped elements agree to ~1e-3).
    ref = reference_forward(params, features, nodes)
    close = jnp.abs(out - ref) <= (5e-3 + 5e-3 * jnp.abs(ref))
    assert float(jnp.mean(close.astype(jnp.float32))) >= 0.9

    print("KERNEL_OK")
</pallas_src>

<mosaic_0001>
module attributes {stable_mosaic.version = 11 : i64} {
  func.func @_spikenet_fused_kernel(%arg0: memref<240x1xi32, #tpu.memory_space<vmem>>, %arg1: memref<128x16xf32, #tpu.memory_space<vmem>>, %arg2: memref<16x33xf32, #tpu.memory_space<vmem>>, %arg3: memref<64x8xf32, #tpu.memory_space<vmem>>, %arg4: memref<1x8xf32, #tpu.memory_space<vmem>>, %arg5: memref<48x8xf32, #tpu.memory_space<vmem>>, %arg6: memref<240x33xf32, #tpu.memory_space<vmem>>) attributes {dimension_semantics = [], scalar_prefetch = 0 : i64, scratch_operands = 1 : i64, tpu.core_type = #tpu.core_type<tc>} {
    %0 = tpu.iota {dimensions = array<i32: 1>} : vector<240x128xi32>
    %c0 = arith.constant 0 : index
    %c0_0 = arith.constant 0 : index
    %1 = vector.load %arg0[%c0, %c0_0] : memref<240x1xi32, #tpu.memory_space<vmem>>, vector<240x1xi32>
    %2 = vector.broadcast %1 : vector<240x1xi32> to vector<240x128xi32>
    %3 = arith.cmpi eq, %0, %2 : vector<240x128xi32>
    %4 = arith.extui %3 : vector<240x128xi1> to vector<240x128xi32>
    %5 = arith.sitofp %4 : vector<240x128xi32> to vector<240x128xf32>
    %c0_1 = arith.constant 0 : index
    %c0_2 = arith.constant 0 : index
    %6 = vector.load %arg1[%c0_1, %c0_2] : memref<128x16xf32, #tpu.memory_space<vmem>>, vector<128x16xf32>
    %cst = arith.constant dense<0.000000e+00> : vector<240x16xf32>
    %7 = tpu.matmul %5, %6, %cst {dimension_numbers = #tpu.dot_dimension_numbers<[1], [0], [0], [1], [0, 0, 1, 1], [], []>} : vector<240x128xf32>, vector<128x16xf32>, vector<240x16xf32> -> vector<240x16xf32>
    %c0_3 = arith.constant 0 : index
    %c0_4 = arith.constant 0 : index
    %8 = vector.load %arg2[%c0_3, %c0_4] : memref<16x33xf32, #tpu.memory_space<vmem>>, vector<16x33xf32>
    %cst_5 = arith.constant dense<0.000000e+00> : vector<240x33xf32>
    %9 = tpu.matmul %7, %8, %cst_5 {dimension_numbers = #tpu.dot_dimension_numbers<[1], [0], [0], [1], [0, 0, 1, 1], [], []>} : vector<240x16xf32>, vector<16x33xf32>, vector<240x33xf32> -> vector<240x33xf32>
    %c0_6 = arith.constant 0 : index
    %c0_7 = arith.constant 0 : index
    %10 = vector.load %arg6[%c0_6, %c0_7] : memref<240x33xf32, #tpu.memory_space<vmem>>, vector<240x33xf32>
    tpu.vector_store %arg6[%c0_6, %c0_7], %9 {strides = array<i32>} : memref<240x33xf32, #tpu.memory_space<vmem>>, vector<240x33xf32>,
    %cst_8 = arith.constant 0.000000e+00 : f32
    %11 = vector.broadcast %cst_8 : f32 to vector<48x32xf32>
    %cst_9 = arith.constant 0.000000e+00 : f32
    %12 = vector.broadcast %cst_9 : f32 to vector<48x8xf32>
    %c0_10 = arith.constant 0 : index
    %c0_11 = arith.constant 0 : index
    %13 = vector.load %arg6[%c0_10, %c0_11] : memref<240x33xf32, #tpu.memory_space<vmem>>, vector<8x33xf32>
    %c8 = arith.constant 8 : index
    %c0_12 = arith.constant 0 : index
    %14 = vector.load %arg6[%c8, %c0_12] : memref<240x33xf32, #tpu.memory_space<vmem>>, vector<8x33xf32>
    %c16 = arith.constant 16 : index
    %c0_13 = arith.constant 0 : index
    %15 = vector.load %arg6[%c16, %c0_13] : memref<240x33xf32, #tpu.memory_space<vmem>>, vector<8x33xf32>
    %c24 = arith.constant 24 : index
    %c0_14 = arith.constant 0 : index
    %16 = vector.load %arg6[%c24, %c0_14] : memref<240x33xf32, #tpu.memory_space<vmem>>, vector<8x33xf32>
    %c32 = arith.constant 32 : index
    %c0_15 = arith.constant 0 : index
    %17 = vector.load %arg6[%c32, %c0_15] : memref<240x33xf32, #tpu.memory_space<vmem>>, vector<8x33xf32>
    %18 = vector.extract_strided_slice %13 {offsets = [0, 32], sizes = [8, 1], strides = [1, 1]} : vector<8x33xf32> to vector<8x1xf32>
    %19 = vector.extract_strided_slice %14 {offsets = [0, 32], sizes = [8, 1], strides = [1, 1]} : vector<8x33xf32> to vector<8x1xf32>
    %20 = vector.extract_strided_slice %15 {offsets = [0, 32], sizes = [8, 1], strides = [1, 1]} : vector<8x33xf32> to vector<8x1xf32>
    %21 = vector.extract_strided_slice %16 {offsets = [0, 32], sizes = [8, 1], strides = [1, 1]} : vector<8x33xf32> to vector<8x1xf32>
    %22 = vector.extract_strided_slice %17 {offsets = [0, 32], sizes = [8, 1], strides = [1, 1]} : vector<8x33xf32> to vector<8x1xf32>
    %23 = arith.maximumf %18, %19 : vector<8x1xf32>
    %24 = arith.maximumf %23, %20 : vector<8x1xf32>
    %25 = arith.maximumf %24, %21 : vector<8x1xf32>
    %26 = arith.maximumf %25, %22 : vector<8x1xf32>
    %27 = arith.subf %18, %26 : vector<8x1xf32>
    %28 = math.exp %27 : vector<8x1xf32>
    %29 = arith.subf %19, %26 : vector<8x1xf32>
    %30 = math.exp %29 : vector<8x1xf32>
    %31 = arith.subf %20, %26 : vector<8x1xf32>
    %32 = math.exp %31 : vector<8x1xf32>
    %33 = arith.subf %21, %26 : vector<8x1xf32>
    %34 = math.exp %33 : vector<8x1xf32>
    %35 = arith.subf %22, %26 : vector<8x1xf32>
    %36 = math.exp %35 : vector<8x1xf32>
    %37 = arith.addf %28, %30 : vector<8x1xf32>
    %38 = arith.addf %37, %32 : vector<8x1xf32>
    %39 = arith.addf %38, %34 : vector<8x1xf32>
    %40 = arith.addf %39, %36 : vector<8x1xf32>
    %41 = vector.extract_strided_slice %13 {offsets = [0, 0], sizes = [8, 32], strides = [1, 1]} : vector<8x33xf32> to vector<8x32xf32>
    %42 = vector.broadcast %28 : vector<8x1xf32> to vector<8x32xf32>
    %43 = arith.mulf %42, %41 : vector<8x32xf32>
    %44 = vector.extract_strided_slice %14 {offsets = [0, 0], sizes = [8, 32], strides = [1, 1]} : vector<8x33xf32> to vector<8x32xf32>
    %45 = vector.broadcast %30 : vector<8x1xf32> to vector<8x32xf32>
    %46 = arith.mulf %45, %44 : vector<8x32xf32>
    %47 = arith.addf %43, %46 : vector<8x32xf32>
    %48 = vector.extract_strided_slice %15 {offsets = [0, 0], sizes = [8, 32], strides = [1, 1]} : vector<8x33xf32> to vector<8x32xf32>
    %49 = vector.broadcast %32 : vector<8x1xf32> to vector<8x32xf32>
    %50 = arith.mulf %49, %48 : vector<8x32xf32>
    %51 = arith.addf %47, %50 : vector<8x32xf32>
    %52 = vector.extract_strided_slice %16 {offsets = [0, 0], sizes = [8, 32], strides = [1, 1]} : vector<8x33xf32> to vector<8x32xf32>
    %53 = vector.broadcast %34 : vector<8x1xf32> to vector<8x32xf32>
    %54 = arith.mulf %53, %52 : vector<8x32xf32>
    %55 = arith.addf %51, %54 : vector<8x32xf32>
    %56 = vector.extract_strided_slice %17 {offsets = [0, 0], sizes = [8, 32], strides = [1, 1]} : vector<8x33xf32> to vector<8x32xf32>
    %57 = vector.broadcast %36 : vector<8x1xf32> to vector<8x32xf32>
    %58 = arith.mulf %57, %56 : vector<8x32xf32>
    %59 = arith.addf %55, %58 : vector<8x32xf32>
    %60 = vector.broadcast %40 : vector<8x1xf32> to vector<8x32xf32>
    %61 = arith.divf %59, %60 : vector<8x32xf32>
    %c40 = arith.constant 40 : index
    %c0_16 = arith.constant 0 : index
    %62 = vector.load %arg6[%c40, %c0_16] : memref<240x33xf32, #tpu.memory_space<vmem>>, vector<40x33xf32>
    %c80 = arith.constant 80 : index
    %c0_17 = arith.constant 0 : index
    %63 = vector.load %arg6[%c80, %c0_17] : memref<240x33xf32, #tpu.memory_space<vmem>>, vector<40x33xf32>
    %64 = vector.extract_strided_slice %62 {offsets = [0, 32], sizes = [40, 1], strides = [1, 1]} : vector<40x33xf32> to vector<40x1xf32>
    %65 = vector.extract_strided_slice %63 {offsets = [0, 32], sizes = [40, 1], strides = [1, 1]} : vector<40x33xf32> to vector<40x1xf32>
    %66 = arith.maximumf %64, %65 : vector<40x1xf32>
    %67 = arith.subf %64, %66 : vector<40x1xf32>
    %68 = math.exp %67 : vector<40x1xf32>
    %69 = arith.subf %65, %66 : vector<40x1xf32>
    %70 = math.exp %69 : vector<40x1xf32>
    %71 = arith.addf %68, %70 : vector<40x1xf32>
    %72 = vector.extract_strided_slice %62 {offsets = [0, 0], sizes = [40, 32], strides = [1, 1]} : vector<40x33xf32> to vector<40x32xf32>
    %73 = vector.broadcast %68 : vector<40x1xf32> to vector<40x32xf32>
    %74 = arith.mulf %73, %72 : vector<40x32xf32>
    %75 = vector.extract_strided_slice %63 {offsets = [0, 0], sizes = [40, 32], strides = [1, 1]} : vector<40x33xf32> to vector<40x32xf32>
    %76 = vector.broadcast %70 : vector<40x1xf32> to vector<40x32xf32>
    %77 = arith.mulf %76, %75 : vector<40x32xf32>
    %78 = arith.addf %74, %77 : vector<40x32xf32>
    %79 = vector.broadcast %71 : vector<40x1xf32> to vector<40x32xf32>
    %80 = arith.divf %78, %79 : vector<40x32xf32>
    %81 = tpu.concatenate %61, %80 in 0 : vector<8x32xf32>, vector<40x32xf32> -> vector<48x32xf32>
    %82 = arith.subf %81, %11 : vector<48x32xf32>
    %cst_18 = arith.constant 1.000000e+00 : f32
    %83 = vector.broadcast %cst_18 : f32 to vector<48x32xf32>
    %84 = arith.mulf %82, %83 : vector<48x32xf32>
    %85 = arith.addf %11, %84 : vector<48x32xf32>
    %cst_19 = arith.constant 1.000000e+00 : f32
    %86 = vector.broadcast %cst_19 : f32 to vector<48x32xf32>
    %87 = arith.cmpf oge, %85, %86 : vector<48x32xf32>
    %88 = arith.extui %87 : vector<48x32xi1> to vector<48x32xi32>
    %89 = arith.sitofp %88 : vector<48x32xi32> to vector<48x32xf32>
    %cst_20 = arith.constant 1.000000e+00 : f32
    %90 = vector.broadcast %cst_20 : f32 to vector<48x32xf32>
    %91 = arith.subf %90, %89 : vector<48x32xf32>
    %92 = arith.mulf %85, %91 : vector<48x32xf32>
    %c0_21 = arith.constant 0 : index
    %c0_22 = arith.constant 0 : index
    %93 = vector.load %arg3[%c0_21, %c0_22] : memref<64x8xf32, #tpu.memory_space<vmem>>, vector<32x8xf32>
    %cst_23 = arith.constant dense<0.000000e+00> : vector<48x8xf32>
    %94 = tpu.matmul %89, %93, %cst_23 {dimension_numbers = #tpu.dot_dimension_numbers<[1], [0], [0], [1], [0, 0, 1, 1], [], []>} : vector<48x32xf32>, vector<32x8xf32>, vector<48x8xf32> -> vector<48x8xf32>
    %95 = arith.addf %12, %94 : vector<48x8xf32>
    %c120 = arith.constant 120 : index
    %c0_24 = arith.constant 0 : index
    %96 = vector.load %arg6[%c120, %c0_24] : memref<240x33xf32, #tpu.memory_space<vmem>>, vector<8x33xf32>
    %c128 = arith.constant 128 : index
    %c0_25 = arith.constant 0 : index
    %97 = vector.load %arg6[%c128, %c0_25] : memref<240x33xf32, #tpu.memory_space<vmem>>, vector<8x33xf32>
    %c136 = arith.constant 136 : index
    %c0_26 = arith.constant 0 : index
    %98 = vector.load %arg6[%c136, %c0_26] : memref<240x33xf32, #tpu.memory_space<vmem>>, vector<8x33xf32>
    %c144 = arith.constant 144 : index
    %c0_27 = arith.constant 0 : index
    %99 = vector.load %arg6[%c144, %c0_27] : memref<240x33xf32, #tpu.memory_space<vmem>>, vector<8x33xf32>
    %c152 = arith.constant 152 : index
    %c0_28 = arith.constant 0 : index
    %100 = vector.load %arg6[%c152, %c0_28] : memref<240x33xf32, #tpu.memory_space<vmem>>, vector<8x33xf32>
    %101 = vector.extract_strided_slice %96 {offsets = [0, 32], sizes = [8, 1], strides = [1, 1]} : vector<8x33xf32> to vector<8x1xf32>
    %102 = vector.extract_strided_slice %97 {offsets = [0, 32], sizes = [8, 1], strides = [1, 1]} : vector<8x33xf32> to vector<8x1xf32>
    %103 = vector.extract_strided_slice %98 {offsets = [0, 32], sizes = [8, 1], strides = [1, 1]} : vector<8x33xf32> to vector<8x1xf32>
    %104 = vector.extract_strided_slice %99 {offsets = [0, 32], sizes = [8, 1], strides = [1, 1]} : vector<8x33xf32> to vector<8x1xf32>
    %105 = vector.extract_strided_slice %100 {offsets = [0, 32], sizes = [8, 1], strides = [1, 1]} : vector<8x33xf32> to vector<8x1xf32>
    %106 = arith.maximumf %101, %102 : vector<8x1xf32>
    %107 = arith.maximumf %106, %103 : vector<8x1xf32>
    %108 = arith.maximumf %107, %104 : vector<8x1xf32>
    %109 = arith.maximumf %108, %105 : vector<8x1xf32>
    %110 = arith.subf %101, %109 : vector<8x1xf32>
    %111 = math.exp %110 : vector<8x1xf32>
    %112 = arith.subf %102, %109 : vector<8x1xf32>
    %113 = math.exp %112 : vector<8x1xf32>
    %114 = arith.subf %103, %109 : vector<8x1xf32>
    %115 = math.exp %114 : vector<8x1xf32>
    %116 = arith.subf %104, %109 : vector<8x1xf32>
    %117 = math.exp %116 : vector<8x1xf32>
    %118 = arith.subf %105, %109 : vector<8x1xf32>
    %119 = math.exp %118 : vector<8x1xf32>
    %120 = arith.addf %111, %113 : vector<8x1xf32>
    %121 = arith.addf %120, %115 : vector<8x1xf32>
    %122 = arith.addf %121, %117 : vector<8x1xf32>
    %123 = arith.addf %122, %119 : vector<8x1xf32>
    %124 = vector.extract_strided_slice %96 {offsets = [0, 0], sizes = [8, 32], strides = [1, 1]} : vector<8x33xf32> to vector<8x32xf32>
    %125 = vector.broadcast %111 : vector<8x1xf32> to vector<8x32xf32>
    %126 = arith.mulf %125, %124 : vector<8x32xf32>
    %127 = vector.extract_strided_slice %97 {offsets = [0, 0], sizes = [8, 32], strides = [1, 1]} : vector<8x33xf32> to vector<8x32xf32>
    %128 = vector.broadcast %113 : vector<8x1xf32> to vector<8x32xf32>
    %129 = arith.mulf %128, %127 : vector<8x32xf32>
    %130 = arith.addf %126, %129 : vector<8x32xf32>
    %131 = vector.extract_strided_slice %98 {offsets = [0, 0], sizes = [8, 32], strides = [1, 1]} : vector<8x33xf32> to vector<8x32xf32>
    %132 = vector.broadcast %115 : vector<8x1xf32> to vector<8x32xf32>
    %133 = arith.mulf %132, %131 : vector<8x32xf32>
    %134 = arith.addf %130, %133 : vector<8x32xf32>
    %135 = vector.extract_strided_slice %99 {offsets = [0, 0], sizes = [8, 32], strides = [1, 1]} : vector<8x33xf32> to vector<8x32xf32>
    %136 = vector.broadcast %117 : vector<8x1xf32> to vector<8x32xf32>
    %137 = arith.mulf %136, %135 : vector<8x32xf32>
    %138 = arith.addf %134, %137 : vector<8x32xf32>
    %139 = vector.extract_strided_slice %100 {offsets = [0, 0], sizes = [8, 32], strides = [1, 1]} : vector<8x33xf32> to vector<8x32xf32>
    %140 = vector.broadcast %119 : vector<8x1xf32> to vector<8x32xf32>
    %141 = arith.mulf %140, %139 : vector<8x32xf32>
    %142 = arith.addf %138, %141 : vector<8x32xf32>
    %143 = vector.broadcast %123 : vector<8x1xf32> to vector<8x32xf32>
    %144 = arith.divf %142, %143 : vector<8x32xf32>
    %c160 = arith.constant 160 : index
    %c0_29 = arith.constant 0 : index
    %145 = vector.load %arg6[%c160, %c0_29] : memref<240x33xf32, #tpu.memory_space<vmem>>, vector<40x33xf32>
    %c200 = arith.constant 200 : index
    %c0_30 = arith.constant 0 : index
    %146 = vector.load %arg6[%c200, %c0_30] : memref<240x33xf32, #tpu.memory_space<vmem>>, vector<40x33xf32>
    %147 = vector.extract_strided_slice %145 {offsets = [0, 32], sizes = [40, 1], strides = [1, 1]} : vector<40x33xf32> to vector<40x1xf32>
    %148 = vector.extract_strided_slice %146 {offsets = [0, 32], sizes = [40, 1], strides = [1, 1]} : vector<40x33xf32> to vector<40x1xf32>
    %149 = arith.maximumf %147, %148 : vector<40x1xf32>
    %150 = arith.subf %147, %149 : vector<40x1xf32>
    %151 = math.exp %150 : vector<40x1xf32>
    %152 = arith.subf %148, %149 : vector<40x1xf32>
    %153 = math.exp %152 : vector<40x1xf32>
    %154 = arith.addf %151, %153 : vector<40x1xf32>
    %155 = vector.extract_strided_slice %145 {offsets = [0, 0], sizes = [40, 32], strides = [1, 1]} : vector<40x33xf32> to vector<40x32xf32>
    %156 = vector.broadcast %151 : vector<40x1xf32> to vector<40x32xf32>
    %157 = arith.mulf %156, %155 : vector<40x32xf32>
    %158 = vector.extract_strided_slice %146 {offsets = [0, 0], sizes = [40, 32], strides = [1, 1]} : vector<40x33xf32> to vector<40x32xf32>
    %159 = vector.broadcast %153 : vector<40x1xf32> to vector<40x32xf32>
    %160 = arith.mulf %159, %158 : vector<40x32xf32>
    %161 = arith.addf %157, %160 : vector<40x32xf32>
    %162 = vector.broadcast %154 : vector<40x1xf32> to vector<40x32xf32>
    %163 = arith.divf %161, %162 : vector<40x32xf32>
    %164 = tpu.concatenate %144, %163 in 0 : vector<8x32xf32>, vector<40x32xf32> -> vector<48x32xf32>
    %165 = arith.subf %164, %92 : vector<48x32xf32>
    %cst_31 = arith.constant 1.000000e+00 : f32
    %166 = vector.broadcast %cst_31 : f32 to vector<48x32xf32>
    %167 = arith.mulf %165, %166 : vector<48x32xf32>
    %168 = arith.addf %92, %167 : vector<48x32xf32>
    %cst_32 = arith.constant 1.000000e+00 : f32
    %169 = vector.broadcast %cst_32 : f32 to vector<48x32xf32>
    %170 = arith.cmpf oge, %168, %169 : vector<48x32xf32>
    %171 = arith.extui %170 : vector<48x32xi1> to vector<48x32xi32>
    %172 = arith.sitofp %171 : vector<48x32xi32> to vector<48x32xf32>
    %c32_33 = arith.constant 32 : index
    %c0_34 = arith.constant 0 : index
    %173 = vector.load %arg3[%c32_33, %c0_34] : memref<64x8xf32, #tpu.memory_space<vmem>>, vector<32x8xf32>
    %cst_35 = arith.constant dense<0.000000e+00> : vector<48x8xf32>
    %174 = tpu.matmul %172, %173, %cst_35 {dimension_numbers = #tpu.dot_dimension_numbers<[1], [0], [0], [1], [0, 0, 1, 1], [], []>} : vector<48x32xf32>, vector<32x8xf32>, vector<48x8xf32> -> vector<48x8xf32>
    %175 = arith.addf %95, %174 : vector<48x8xf32>
    %c0_36 = arith.constant 0 : index
    %c0_37 = arith.constant 0 : index
    %176 = vector.load %arg4[%c0_36, %c0_37] : memref<1x8xf32, #tpu.memory_space<vmem>>, vector<1x8xf32>
    %177 = vector.broadcast %176 : vector<1x8xf32> to vector<48x8xf32>
    %178 = arith.addf %175, %177 : vector<48x8xf32>
    %c0_38 = arith.constant 0 : index
    %c0_39 = arith.constant 0 : index
    %179 = vector.load %arg5[%c0_38, %c0_39] : memref<48x8xf32, #tpu.memory_space<vmem>>, vector<48x8xf32>
    tpu.vector_store %arg5[%c0_38, %c0_39], %178 {strides = array<i32>} : memref<48x8xf32, #tpu.memory_space<vmem>>, vector<48x8xf32>,
    return
  }
}

</mosaic_0001>

<llo_original>
// kernel: spikenet_forward.1
$region0: #{spikenet_forward.1}
  #allocation0 [shape = 'u32[]', space=smem, size = 0x4, offset = 0x4, fixed_abs, tag = 'smem constant byte address 0x4 - core index']
  #allocation1 [shape = 'u32[144,128]{1,0:T(1,128)}', space=vmem, size = 0x12000, scoped, tag = 'internal scratch']
  #allocation2 [shape = 'f32[240,33]{1,0:T(8,128)}', space=vmem, size = 0x1e000, scoped, tag = 'scratch operand']
  %s0 = inlined_call_operand.vmem [shape: s32[240,1], index: 0, kind: input, shape index: {}]
  %s1 = inlined_call_operand.vmem [shape: f32[128,16], index: 1, kind: input, shape index: {}]
  %s2 = inlined_call_operand.vmem [shape: f32[16,33], index: 2, kind: input, shape index: {}]
  %s3 = inlined_call_operand.vmem [shape: f32[64,8], index: 3, kind: input, shape index: {}]
  %s4 = inlined_call_operand.vmem [shape: f32[1,8], index: 4, kind: input, shape index: {}]
  %s5 = inlined_call_operand.vmem [shape: f32[48,8], index: 5, kind: output, shape index: {}]
  %s6 = sld [smem:[#allocation0]]
  $region30: #{spikenet_forward.1} parent=0
    _
  %s8 = ssub.s32 1, %s6
  %s9 = scalar_select 0, %s8, %s6
  // Predicated region
  $region2: #{spikenet_forward.1} parent=0 // pred_check
    _
  $region3: #{spikenet_forward.1} parent=0 // pred_check_branch
    %11 = sbr.rel (0) target = $region5
  $region4: #{spikenet_forward.1} parent=0 // pred_region
    _
  $region5: #{spikenet_forward.1} parent=0 // pred_fallthru
    _
  // Predicated region
  $region6: #{spikenet_forward.1} parent=0 // pred_check
    _
  $region7: #{spikenet_forward.1} parent=0 // pred_check_branch
    %13 = sbr.rel (0) target = $region9
  $region8: #{spikenet_forward.1} parent=0 // pred_region
    _
  $region9: #{spikenet_forward.1} parent=0 // pred_fallthru
    _
  // Predicated region
  $region10: #{spikenet_forward.1} parent=0 // pred_check
    _
  $region11: #{spikenet_forward.1} parent=0 // pred_check_branch
    %15 = sbr.rel (0) target = $region13
  $region12: #{spikenet_forward.1} parent=0 // pred_region
    _
  $region13: #{spikenet_forward.1} parent=0 // pred_fallthru
    _
  // Predicated region
  $region14: #{spikenet_forward.1} parent=0 // pred_check
    _
  $region15: #{spikenet_forward.1} parent=0 // pred_check_branch
    %17 = sbr.rel (0) target = $region17
  $region16: #{spikenet_forward.1} parent=0 // pred_region
    _
  $region17: #{spikenet_forward.1} parent=0 // pred_fallthru
    _
  // Predicated region
  $region18: #{spikenet_forward.1} parent=0 // pred_check
    _
  $region19: #{spikenet_forward.1} parent=0 // pred_check_branch
    %19 = sbr.rel (0) target = $region21
  $region20: #{spikenet_forward.1} parent=0 // pred_region
    _
  $region21: #{spikenet_forward.1} parent=0 // pred_fallthru
    _
  %v20 = vlaneseq
  %v21 = vand.u32 %v20, 127
  %v22 = vld [vmem:[%s0] sm:$0xff]
  %v23 = vld [vmem:[%s0 + $0x8] sm:$0xff]
  %v24 = vld [vmem:[%s0 + $0x10] sm:$0xff]
  %v25 = vld [vmem:[%s0 + $0x18] sm:$0xff]
  %v26 = vld [vmem:[%s0 + $0x20] sm:$0xff]
  %v27 = vld [vmem:[%s0 + $0x28] sm:$0xff]
  %v28 = vld [vmem:[%s0 + $0x30] sm:$0xff]
  %v29 = vld [vmem:[%s0 + $0x38] sm:$0xff]
  %v30 = vld [vmem:[%s0 + $0x40] sm:$0xff]
  %v31 = vld [vmem:[%s0 + $0x48] sm:$0xff]
  %v32 = vld [vmem:[%s0 + $0x50] sm:$0xff]
  %v33 = vld [vmem:[%s0 + $0x58] sm:$0xff]
  %v34 = vld [vmem:[%s0 + $0x60] sm:$0xff]
  %v35 = vld [vmem:[%s0 + $0x68] sm:$0xff]
  %v36 = vld [vmem:[%s0 + $0x70] sm:$0xff]
  %v37 = vld [vmem:[%s0 + $0x78] sm:$0xff]
  %v38 = vld [vmem:[%s0 + $0x80] sm:$0xff]
  %v39 = vld [vmem:[%s0 + $0x88] sm:$0xff]
  %v40 = vld [vmem:[%s0 + $0x90] sm:$0xff]
  %v41 = vld [vmem:[%s0 + $0x98] sm:$0xff]
  %v42 = vld [vmem:[%s0 + $0xa0] sm:$0xff]
  %v43 = vld [vmem:[%s0 + $0xa8] sm:$0xff]
  %v44 = vld [vmem:[%s0 + $0xb0] sm:$0xff]
  %v45 = vld [vmem:[%s0 + $0xb8] sm:$0xff]
  %v46 = vld [vmem:[%s0 + $0xc0] sm:$0xff]
  %v47 = vld [vmem:[%s0 + $0xc8] sm:$0xff]
  %v48 = vld [vmem:[%s0 + $0xd0] sm:$0xff]
  %v49 = vld [vmem:[%s0 + $0xd8] sm:$0xff]
  %v50 = vld [vmem:[%s0 + $0xe0] sm:$0xff]
  %v51 = vld [vmem:[%s0 + $0xe8] sm:$0xff]
  %52 = vset.pattern.permute.xlu0 0
  %53 = vperm.xlu0 %52, %v22
  %v54 = vpop.permute.xlu0 %53
  %55 = vset.pattern.permute.xlu0 0
  %56 = vperm.xlu0 %55, %v23
  %v57 = vpop.permute.xlu0 %56
  %58 = vset.pattern.permute.xlu0 0
  %59 = vperm.xlu0 %58, %v24
  %v60 = vpop.permute.xlu0 %59
  %61 = vset.pattern.permute.xlu0 0
  %62 = vperm.xlu0 %61, %v25
  %v63 = vpop.permute.xlu0 %62
  %64 = vset.pattern.permute.xlu0 0
  %65 = vperm.xlu0 %64, %v26
  %v66 = vpop.permute.xlu0 %65
  %67 = vset.pattern.permute.xlu0 0
  %68 = vperm.xlu0 %67, %v27
  %v69 = vpop.permute.xlu0 %68
  %70 = vset.pattern.permute.xlu0 0
  %71 = vperm.xlu0 %70, %v28
  %v72 = vpop.permute.xlu0 %71
  %73 = vset.pattern.permute.xlu0 0
  %74 = vperm.xlu0 %73, %v29
  %v75 = vpop.permute.xlu0 %74
  %76 = vset.pattern.permute.xlu0 0
  %77 = vperm.xlu0 %76, %v30
  %v78 = vpop.permute.xlu0 %77
  %79 = vset.pattern.permute.xlu0 0
  %80 = vperm.xlu0 %79, %v31
  %v81 = vpop.permute.xlu0 %80
  %82 = vset.pattern.permute.xlu0 0
  %83 = vperm.xlu0 %82, %v32
  %v84 = vpop.permute.xlu0 %83
  %85 = vset.pattern.permute.xlu0 0
  %86 = vperm.xlu0 %85, %v33
  %v87 = vpop.permute.xlu0 %86
  %88 = vset.pattern.permute.xlu0 0
  %89 = vperm.xlu0 %88, %v34
  %v90 = vpop.permute.xlu0 %89
  %91 = vset.pattern.permute.xlu0 0
  %92 = vperm.xlu0 %91, %v35
  %v93 = vpop.permute.xlu0 %92
  %94 = vset.pattern.permute.xlu0 0
  %95 = vperm.xlu0 %94, %v36
  %v96 = vpop.permute.xlu0 %95
  %97 = vset.pattern.permute.xlu0 0
  %98 = vperm.xlu0 %97, %v37
  %v99 = vpop.permute.xlu0 %98
  %100 = vset.pattern.permute.xlu0 0
  %101 = vperm.xlu0 %100, %v38
  %v102 = vpop.permute.xlu0 %101
  %103 = vset.pattern.permute.xlu0 0
  %104 = vperm.xlu0 %103, %v39
  %v105 = vpop.permute.xlu0 %104
  %106 = vset.pattern.permute.xlu0 0
  %107 = vperm.xlu0 %106, %v40
  %v108 = vpop.permute.xlu0 %107
  %109 = vset.pattern.permute.xlu0 0
  %110 = vperm.xlu0 %109, %v41
  %v111 = vpop.permute.xlu0 %110
  %112 = vset.pattern.permute.xlu0 0
  %113 = vperm.xlu0 %112, %v42
  %v114 = vpop.permute.xlu0 %113
  %115 = vset.pattern.permute.xlu0 0
  %116 = vperm.xlu0 %115, %v43
  %v117 = vpop.permute.xlu0 %116
  %118 = vset.pattern.permute.xlu0 0
  %119 = vperm.xlu0 %118, %v44
  %v120 = vpop.permute.xlu0 %119
  %121 = vset.pattern.permute.xlu0 0
  %122 = vperm.xlu0 %121, %v45
  %v123 = vpop.permute.xlu0 %122
  %124 = vset.pattern.permute.xlu0 0
  %125 = vperm.xlu0 %124, %v46
  %v126 = vpop.permute.xlu0 %125
  %127 = vset.pattern.permute.xlu0 0
  %128 = vperm.xlu0 %127, %v47
  %v129 = vpop.permute.xlu0 %128
  %130 = vset.pattern.permute.xlu0 0
  %131 = vperm.xlu0 %130, %v48
  %v132 = vpop.permute.xlu0 %131
  %133 = vset.pattern.permute.xlu0 0
  %134 = vperm.xlu0 %133, %v49
  %v135 = vpop.permute.xlu0 %134
  %136 = vset.pattern.permute.xlu0 0
  %137 = vperm.xlu0 %136, %v50
  %v138 = vpop.permute.xlu0 %137
  %139 = vset.pattern.permute.xlu0 0
  %140 = vperm.xlu0 %139, %v51
  %v141 = vpop.permute.xlu0 %140
  %vm142 = vcmp.eq.s32.totalorder %v21, %v54
  %vm143 = vcmp.eq.s32.totalorder %v21, %v57
  %vm144 = vcmp.eq.s32.totalorder %v21, %v60
  %vm145 = vcmp.eq.s32.totalorder %v21, %v63
  %vm146 = vcmp.eq.s32.totalorder %v21, %v66
  %vm147 = vcmp.eq.s32.totalorder %v21, %v69
  %vm148 = vcmp.eq.s32.totalorder %v21, %v72
  %vm149 = vcmp.eq.s32.totalorder %v21, %v75
  %vm150 = vcmp.eq.s32.totalorder %v21, %v78
  %vm151 = vcmp.eq.s32.totalorder %v21, %v81
  %vm152 = vcmp.eq.s32.totalorder %v21, %v84
  %vm153 = vcmp.eq.s32.totalorder %v21, %v87
  %vm154 = vcmp.eq.s32.totalorder %v21, %v90
  %vm155 = vcmp.eq.s32.totalorder %v21, %v93
  %vm156 = vcmp.eq.s32.totalorder %v21, %v96
  %vm157 = vcmp.eq.s32.totalorder %v21, %v99
  %vm158 = vcmp.eq.s32.totalorder %v21, %v102
  %vm159 = vcmp.eq.s32.totalorder %v21, %v105
  %vm160 = vcmp.eq.s32.totalorder %v21, %v108
  %vm161 = vcmp.eq.s32.totalorder %v21, %v111
  %vm162 = vcmp.eq.s32.totalorder %v21, %v114
  %vm163 = vcmp.eq.s32.totalorder %v21, %v117
  %vm164 = vcmp.eq.s32.totalorder %v21, %v120
  %vm165 = vcmp.eq.s32.totalorder %v21, %v123
  %vm166 = vcmp.eq.s32.totalorder %v21, %v126
  %vm167 = vcmp.eq.s32.totalorder %v21, %v129
  %vm168 = vcmp.eq.s32.totalorder %v21, %v132
  %vm169 = vcmp.eq.s32.totalorder %v21, %v135
  %vm170 = vcmp.eq.s32.totalorder %v21, %v138
  %vm171 = vcmp.eq.s32.totalorder %v21, %v141
  %v172 = vsel %vm142, 1, 0
  %v173 = vsel %vm143, 1, 0
  %v174 = vsel %vm144, 1, 0
  %v175 = vsel %vm145, 1, 0
  %v176 = vsel %vm146, 1, 0
  %v177 = vsel %vm147, 1, 0
  %v178 = vsel %vm148, 1, 0
  %v179 = vsel %vm149, 1, 0
  %v180 = vsel %vm150, 1, 0
  %v181 = vsel %vm151, 1, 0
  %v182 = vsel %vm152, 1, 0
  %v183 = vsel %vm153, 1, 0
  %v184 = vsel %vm154, 1, 0
  %v185 = vsel %vm155, 1, 0
  %v186 = vsel %vm156, 1, 0
  %v187 = vsel %vm157, 1, 0
  %v188 = vsel %vm158, 1, 0
  %v189 = vsel %vm159, 1, 0
  %v190 = vsel %vm160, 1, 0
  %v191 = vsel %vm161, 1, 0
  %v192 = vsel %vm162, 1, 0
  %v193 = vsel %vm163, 1, 0
  %v194 = vsel %vm164, 1, 0
  %v195 = vsel %vm165, 1, 0
  %v196 = vsel %vm166, 1, 0
  %v197 = vsel %vm167, 1, 0
  %v198 = vsel %vm168, 1, 0
  %v199 = vsel %vm169, 1, 0
  %v200 = vsel %vm170, 1, 0
  %v201 = vsel %vm171, 1, 0
  %v202 = vcvt.s32.f32 %v172
  %v203 = vcvt.s32.f32 %v173
  %v204 = vcvt.s32.f32 %v174
  %v205 = vcvt.s32.f32 %v175
  %v206 = vcvt.s32.f32 %v176
  %v207 = vcvt.s32.f32 %v177
  %v208 = vcvt.s32.f32 %v178
  %v209 = vcvt.s32.f32 %v179
  %v210 = vcvt.s32.f32 %v180
  %v211 = vcvt.s32.f32 %v181
  %v212 = vcvt.s32.f32 %v182
  %v213 = vcvt.s32.f32 %v183
  %v214 = vcvt.s32.f32 %v184
  %v215 = vcvt.s32.f32 %v185
  %v216 = vcvt.s32.f32 %v186
  %v217 = vcvt.s32.f32 %v187
  %v218 = vcvt.s32.f32 %v188
  %v219 = vcvt.s32.f32 %v189
  %v220 = vcvt.s32.f32 %v190
  %v221 = vcvt.s32.f32 %v191
  %v222 = vcvt.s32.f32 %v192
  %v223 = vcvt.s32.f32 %v193
  %v224 = vcvt.s32.f32 %v194
  %v225 = vcvt.s32.f32 %v195
  %v226 = vcvt.s32.f32 %v196
  %v227 = vcvt.s32.f32 %v197
  %v228 = vcvt.s32.f32 %v198
  %v229 = vcvt.s32.f32 %v199
  %v230 = vcvt.s32.f32 %v200
  %v231 = vcvt.s32.f32 %v201
  %v232 = vld [vmem:[%s1] sm:$0xff]
  %v233 = vld [vmem:[%s1 + $0x8] sm:$0xff]
  %v234 = vld [vmem:[%s1 + $0x10] sm:$0xff]
  %v235 = vld [vmem:[%s1 + $0x18] sm:$0xff]
  %v236 = vld [vmem:[%s1 + $0x20] sm:$0xff]
  %v237 = vld [vmem:[%s1 + $0x28] sm:$0xff]
  %v238 = vld [vmem:[%s1 + $0x30] sm:$0xff]
  %v239 = vld [vmem:[%s1 + $0x38] sm:$0xff]
  %v240 = vld [vmem:[%s1 + $0x40] sm:$0xff]
  %v241 = vld [vmem:[%s1 + $0x48] sm:$0xff]
  %v242 = vld [vmem:[%s1 + $0x50] sm:$0xff]
  %v243 = vld [vmem:[%s1 + $0x58] sm:$0xff]
  %v244 = vld [vmem:[%s1 + $0x60] sm:$0xff]
  %v245 = vld [vmem:[%s1 + $0x68] sm:$0xff]
  %v246 = vld [vmem:[%s1 + $0x70] sm:$0xff]
  %v247 = vld [vmem:[%s1 + $0x78] sm:$0xff]
  %248 = vmatprep.subr.mxu0 0.0
  %249 = vmatpush1.msra.mxu0 %v247
  %250 = vmatprep.subr.mxu0 0.0
  %251 = vmatpush1.msra.mxu0 %v246
  %252 = vmatprep.subr.mxu0 0.0
  %253 = vmatpush1.msra.mxu0 %v245
  %254 = vmatprep.subr.mxu0 0.0
  %255 = vmatpush1.msra.mxu0 %v244
  %256 = vmatprep.subr.mxu0 0.0
  %257 = vmatpush1.msra.mxu0 %v243
  %258 = vmatprep.subr.mxu0 0.0
  %259 = vmatpush1.msra.mxu0 %v242
  %260 = vmatprep.subr.mxu0 0.0
  %261 = vmatpush1.msra.mxu0 %v241
  %262 = vmatprep.subr.mxu0 0.0
  %263 = vmatpush1.msra.mxu0 %v240
  %264 = vmatprep.subr.mxu0 0.0
  %265 = vmatpush1.msra.mxu0 %v239
  %266 = vmatprep.subr.mxu0 0.0
  %267 = vmatpush1.msra.mxu0 %v238
  %268 = vmatprep.subr.mxu0 0.0
  %269 = vmatpush1.msra.mxu0 %v237
  %270 = vmatprep.subr.mxu0 0.0
  %271 = vmatpush1.msra.mxu0 %v236
  %272 = vmatprep.subr.mxu0 0.0
  %273 = vmatpush1.msra.mxu0 %v235
  %274 = vmatprep.subr.mxu0 0.0
  %275 = vmatpush1.msra.mxu0 %v234
  %276 = vmatprep.subr.mxu0 0.0
  %277 = vmatpush1.msra.mxu0 %v233
  %278 = vmatprep.subr.mxu0 0.0
  %279 = vmatpush1.msra.mxu0 %v232
  %280 = vmatprep.subr.mxu0 0.0
  %281 = vmatpush2.msra.mxu0 0.0
  %282 = vmatprep.subr.mxu0 0.0
  %283 = vmatpush2.msra.mxu0 0.0
  %284 = vmatprep.subr.mxu0 0.0
  %285 = vmatpush2.msra.mxu0 0.0
  %286 = vmatprep.subr.mxu0 0.0
  %287 = vmatpush2.msra.mxu0 0.0
  %288 = vmatprep.subr.mxu0 0.0
  %289 = vmatpush2.msra.mxu0 0.0
  %290 = vmatprep.subr.mxu0 0.0
  %291 = vmatpush2.msra.mxu0 0.0
  %292 = vmatprep.subr.mxu0 0.0
  %293 = vmatpush2.msra.mxu0 0.0
  %294 = vmatprep.subr.mxu0 0.0
  %295 = vmatpush2.msra.mxu0 0.0
  %296 = vmatprep.subr.mxu0 0.0
  %297 = vmatpush2.msra.mxu0 0.0
  %298 = vmatprep.subr.mxu0 0.0
  %299 = vmatpush2.msra.mxu0 0.0
  %300 = vmatprep.subr.mxu0 0.0
  %301 = vmatpush2.msra.mxu0 0.0
  %302 = vmatprep.subr.mxu0 0.0
  %303 = vmatpush2.msra.mxu0 0.0
  %304 = vmatprep.subr.mxu0 0.0
  %305 = vmatpush2.msra.mxu0 0.0
  %306 = vmatprep.subr.mxu0 0.0
  %307 = vmatpush2.msra.mxu0 0.0
  %308 = vmatprep.subr.mxu0 0.0
  %309 = vmatpush2.msra.mxu0 0.0
  %310 = vmatprep.subr.mxu0 0.0
  %311 = vmatpush2.msra.mxu0 0.0
  %312 = vmatprep.mubr.f32.mxu0 0.0
  %313 = vmatmul.mubr.f32.gmra.mxu0 %v202
  %v314 = vpop.f32.mrf.mxu0
  %v315 = vadd.f32 0.0, %v314
  %v316 = vpop.f32.mrf.mxu0
  %317 = vmatprep.mubr.f32.mxu0 0.0
  %318 = vmatmul.mubr.f32.gmra.mxu0 %v203
  %v319 = vpop.f32.mrf.mxu0
  %v320 = vadd.f32 0.0, %v319
  %v321 = vpop.f32.mrf.mxu0
  %322 = vmatprep.mubr.f32.mxu0 0.0
  %323 = vmatmul.mubr.f32.gmra.mxu0 %v204
  %v324 = vpop.f32.mrf.mxu0
  %v325 = vadd.f32 0.0, %v324
  %v326 = vpop.f32.mrf.mxu0
  %327 = vmatprep.mubr.f32.mxu0 0.0
  %328 = vmatmul.mubr.f32.gmra.mxu0 %v205
  %v329 = vpop.f32.mrf.mxu0
  %v330 = vadd.f32 0.0, %v329
  %v331 = vpop.f32.mrf.mxu0
  %332 = vmatprep.mubr.f32.mxu0 0.0
  %333 = vmatmul.mubr.f32.gmra.mxu0 %v206
  %v334 = vpop.f32.mrf.mxu0
  %v335 = vadd.f32 0.0, %v334
  %v336 = vpop.f32.mrf.mxu0
  %337 = vmatprep.mubr.f32.mxu0 0.0
  %338 = vmatmul.mubr.f32.gmra.mxu0 %v207
  %v339 = vpop.f32.mrf.mxu0
  %v340 = vadd.f32 0.0, %v339
  %v341 = vpop.f32.mrf.mxu0
  %342 = vmatprep.mubr.f32.mxu0 0.0
  %343 = vmatmul.mubr.f32.gmra.mxu0 %v208
  %v344 = vpop.f32.mrf.mxu0
  %v345 = vadd.f32 0.0, %v344
  %v346 = vpop.f32.mrf.mxu0
  %347 = vmatprep.mubr.f32.mxu0 0.0
  %348 = vmatmul.mubr.f32.gmra.mxu0 %v209
  %v349 = vpop.f32.mrf.mxu0
  %v350 = vadd.f32 0.0, %v349
  %v351 = vpop.f32.mrf.mxu0
  %352 = vmatprep.mubr.f32.mxu0 0.0
  %353 = vmatmul.mubr.f32.gmra.mxu0 %v210
  %v354 = vpop.f32.mrf.mxu0
  %v355 = vadd.f32 0.0, %v354
  %v356 = vpop.f32.mrf.mxu0
  %357 = vmatprep.mubr.f32.mxu0 0.0
  %358 = vmatmul.mubr.f32.gmra.mxu0 %v211
  %v359 = vpop.f32.mrf.mxu0
  %v360 = vadd.f32 0.0, %v359
  %v361 = vpop.f32.mrf.mxu0
  %362 = vmatprep.mubr.f32.mxu0 0.0
  %363 = vmatmul.mubr.f32.gmra.mxu0 %v212
  %v364 = vpop.f32.mrf.mxu0
  %v365 = vadd.f32 0.0, %v364
  %v366 = vpop.f32.mrf.mxu0
  %367 = vmatprep.mubr.f32.mxu0 0.0
  %368 = vmatmul.mubr.f32.gmra.mxu0 %v213
  %v369 = vpop.f32.mrf.mxu0
  %v370 = vadd.f32 0.0, %v369
  %v371 = vpop.f32.mrf.mxu0
  %372 = vmatprep.mubr.f32.mxu0 0.0
  %373 = vmatmul.mubr.f32.gmra.mxu0 %v214
  %v374 = vpop.f32.mrf.mxu0
  %v375 = vadd.f32 0.0, %v374
  %v376 = vpop.f32.mrf.mxu0
  %377 = vmatprep.mubr.f32.mxu0 0.0
  %378 = vmatmul.mubr.f32.gmra.mxu0 %v215
  %v379 = vpop.f32.mrf.mxu0
  %v380 = vadd.f32 0.0, %v379
  %v381 = vpop.f32.mrf.mxu0
  %382 = vmatprep.mubr.f32.mxu0 0.0
  %383 = vmatmul.mubr.f32.gmra.mxu0 %v216
  %v384 = vpop.f32.mrf.mxu0
  %v385 = vadd.f32 0.0, %v384
  %v386 = vpop.f32.mrf.mxu0
  %387 = vmatprep.mubr.f32.mxu0 0.0
  %388 = vmatmul.mubr.f32.gmra.mxu0 %v217
  %v389 = vpop.f32.mrf.mxu0
  %v390 = vadd.f32 0.0, %v389
  %v391 = vpop.f32.mrf.mxu0
  %392 = vmatprep.mubr.f32.mxu0 0.0
  %393 = vmatmul.mubr.f32.gmra.mxu0 %v218
  %v394 = vpop.f32.mrf.mxu0
  %v395 = vadd.f32 0.0, %v394
  %v396 = vpop.f32.mrf.mxu0
  %397 = vmatprep.mubr.f32.mxu0 0.0
  %398 = vmatmul.mubr.f32.gmra.mxu0 %v219
  %v399 = vpop.f32.mrf.mxu0
  %v400 = vadd.f32 0.0, %v399
  %v401 = vpop.f32.mrf.mxu0
  %402 = vmatprep.mubr.f32.mxu0 0.0
  %403 = vmatmul.mubr.f32.gmra.mxu0 %v220
  %v404 = vpop.f32.mrf.mxu0
  %v405 = vadd.f32 0.0, %v404
  %v406 = vpop.f32.mrf.mxu0
  %407 = vmatprep.mubr.f32.mxu0 0.0
  %408 = vmatmul.mubr.f32.gmra.mxu0 %v221
  %v409 = vpop.f32.mrf.mxu0
  %v410 = vadd.f32 0.0, %v409
  %v411 = vpop.f32.mrf.mxu0
  %412 = vmatprep.mubr.f32.mxu0 0.0
  %413 = vmatmul.mubr.f32.gmra.mxu0 %v222
  %v414 = vpop.f32.mrf.mxu0
  %v415 = vadd.f32 0.0, %v414
  %v416 = vpop.f32.mrf.mxu0
  %417 = vmatprep.mubr.f32.mxu0 0.0
  %418 = vmatmul.mubr.f32.gmra.mxu0 %v223
  %v419 = vpop.f32.mrf.mxu0
  %v420 = vadd.f32 0.0, %v419
  %v421 = vpop.f32.mrf.mxu0
  %422 = vmatprep.mubr.f32.mxu0 0.0
  %423 = vmatmul.mubr.f32.gmra.mxu0 %v224
  %v424 = vpop.f32.mrf.mxu0
  %v425 = vadd.f32 0.0, %v424
  %v426 = vpop.f32.mrf.mxu0
  %427 = vmatprep.mubr.f32.mxu0 0.0
  %428 = vmatmul.mubr.f32.gmra.mxu0 %v225
  %v429 = vpop.f32.mrf.mxu0
  %v430 = vadd.f32 0.0, %v429
  %v431 = vpop.f32.mrf.mxu0
  %432 = vmatprep.mubr.f32.mxu0 0.0
  %433 = vmatmul.mubr.f32.gmra.mxu0 %v226
  %v434 = vpop.f32.mrf.mxu0
  %v435 = vadd.f32 0.0, %v434
  %v436 = vpop.f32.mrf.mxu0
  %437 = vmatprep.mubr.f32.mxu0 0.0
  %438 = vmatmul.mubr.f32.gmra.mxu0 %v227
  %v439 = vpop.f32.mrf.mxu0
  %v440 = vadd.f32 0.0, %v439
  %v441 = vpop.f32.mrf.mxu0
  %442 = vmatprep.mubr.f32.mxu0 0.0
  %443 = vmatmul.mubr.f32.gmra.mxu0 %v228
  %v444 = vpop.f32.mrf.mxu0
  %v445 = vadd.f32 0.0, %v444
  %v446 = vpop.f32.mrf.mxu0
  %447 = vmatprep.mubr.f32.mxu0 0.0
  %448 = vmatmul.mubr.f32.gmra.mxu0 %v229
  %v449 = vpop.f32.mrf.mxu0
  %v450 = vadd.f32 0.0, %v449
  %v451 = vpop.f32.mrf.mxu0
  %452 = vmatprep.mubr.f32.mxu0 0.0
  %453 = vmatmul.mubr.f32.gmra.mxu0 %v230
  %v454 = vpop.f32.mrf.mxu0
  %v455 = vadd.f32 0.0, %v454
  %v456 = vpop.f32.mrf.mxu0
  %457 = vmatprep.mubr.f32.mxu0 0.0
  %458 = vmatmul.mubr.f32.gmra.mxu0 %v231
  %v459 = vpop.f32.mrf.mxu0
  %v460 = vadd.f32 0.0, %v459
  %v461 = vpop.f32.mrf.mxu0
  %462 = vdwg.mxu0
  %v463 = vld [vmem:[%s2] sm:$0xff]
  %v464 = vld [vmem:[%s2 + $0x8] sm:$0xff]
  %vm465 = vcmask 130048
  %v467 = vsel %vm465, %v315, 0
  %v470 = vsel %vm465, %v320, 0
  %v473 = vsel %vm465, %v325, 0
  %v476 = vsel %vm465, %v330, 0
  %v479 = vsel %vm465, %v335, 0
  %v482 = vsel %vm465, %v340, 0
  %v485 = vsel %vm465, %v345, 0
  %v488 = vsel %vm465, %v350, 0
  %v491 = vsel %vm465, %v355, 0
  %v494 = vsel %vm465, %v360, 0
  %v497 = vsel %vm465, %v365, 0
  %v500 = vsel %vm465, %v370, 0
  %v503 = vsel %vm465, %v375, 0
  %v506 = vsel %vm465, %v380, 0
  %v509 = vsel %vm465, %v385, 0
  %v512 = vsel %vm465, %v390, 0
  %v515 = vsel %vm465, %v395, 0
  %v518 = vsel %vm465, %v400, 0
  %v521 = vsel %vm465, %v405, 0
  %v524 = vsel %vm465, %v410, 0
  %v527 = vsel %vm465, %v415, 0
  %v530 = vsel %vm465, %v420, 0
  %v533 = vsel %vm465, %v425, 0
  %v536 = vsel %vm465, %v430, 0
  %v539 = vsel %vm465, %v435, 0
  %v542 = vsel %vm465, %v440, 0
  %v545 = vsel %vm465, %v445, 0
  %v548 = vsel %vm465, %v450, 0
  %v551 = vsel %vm465, %v455, 0
  %v554 = vsel %vm465, %v460, 0
  %556 = vmatprep.subr.mxu0 0.0
  %557 = vmatpush1.msra.mxu0 0.0
  %558 = vmatprep.subr.mxu0 0.0
  %559 = vmatpush1.msra.mxu0 0.0
  %560 = vmatprep.subr.mxu0 0.0
  %561 = vmatpush1.msra.mxu0 0.0
  %562 = vmatprep.subr.mxu0 0.0
  %563 = vmatpush1.msra.mxu0 0.0
  %564 = vmatprep.subr.mxu0 0.0
  %565 = vmatpush1.msra.mxu0 0.0
  %566 = vmatprep.subr.mxu0 0.0
  %567 = vmatpush1.msra.mxu0 0.0
  %568 = vmatprep.subr.mxu0 0.0
  %569 = vmatpush1.msra.mxu0 0.0
  %570 = vmatprep.subr.mxu0 0.0
  %571 = vmatpush1.msra.mxu0 0.0
  %572 = vmatprep.subr.mxu0 0.0
  %573 = vmatpush1.msra.mxu0 0.0
  %574 = vmatprep.subr.mxu0 0.0
  %575 = vmatpush1.msra.mxu0 0.0
  %576 = vmatprep.subr.mxu0 0.0
  %577 = vmatpush1.msra.mxu0 0.0
  %578 = vmatprep.subr.mxu0 0.0
  %579 = vmatpush1.msra.mxu0 0.0
  %580 = vmatprep.subr.mxu0 0.0
  %581 = vmatpush1.msra.mxu0 0.0
  %582 = vmatprep.subr.mxu0 0.0
  %583 = vmatpush1.msra.mxu0 0.0
  %584 = vmatprep.subr.mxu0 0.0
  %585 = vmatpush1.msra.mxu0 %v464
  %586 = vmatprep.subr.mxu0 0.0
  %587 = vmatpush1.msra.mxu0 %v463
  %588 = vmatprep.subr.mxu0 0.0
  %589 = vmatpush2.msra.mxu0 0.0
  %590 = vmatprep.subr.mxu0 0.0
  %591 = vmatpush2.msra.mxu0 0.0
  %592 = vmatprep.subr.mxu0 0.0
  %593 = vmatpush2.msra.mxu0 0.0
  %594 = vmatprep.subr.mxu0 0.0
  %595 = vmatpush2.msra.mxu0 0.0
  %596 = vmatprep.subr.mxu0 0.0
  %597 = vmatpush2.msra.mxu0 0.0
  %598 = vmatprep.subr.mxu0 0.0
  %599 = vmatpush2.msra.mxu0 0.0
  %600 = vmatprep.subr.mxu0 0.0
  %601 = vmatpush2.msra.mxu0 0.0
  %602 = vmatprep.subr.mxu0 0.0
  %603 = vmatpush2.msra.mxu0 0.0
  %604 = vmatprep.subr.mxu0 0.0
  %605 = vmatpush2.msra.mxu0 0.0
  %606 = vmatprep.subr.mxu0 0.0
  %607 = vmatpush2.msra.mxu0 0.0
  %608 = vmatprep.subr.mxu0 0.0
  %609 = vmatpush2.msra.mxu0 0.0
  %610 = vmatprep.subr.mxu0 0.0
  %611 = vmatpush2.msra.mxu0 0.0
  %612 = vmatprep.subr.mxu0 0.0
  %613 = vmatpush2.msra.mxu0 0.0
  %614 = vmatprep.subr.mxu0 0.0
  %615 = vmatpush2.msra.mxu0 0.0
  %616 = vmatprep.subr.mxu0 0.0
  %617 = vmatpush2.msra.mxu0 0.0
  %618 = vmatprep.subr.mxu0 0.0
  %619 = vmatpush2.msra.mxu0 0.0
  %620 = vmatprep.mubr.f32.mxu0 0.0
  %621 = vmatmul.mubr.f32.gmra.mxu0 %v467
  %v622 = vpop.f32.mrf.mxu0
  %v623 = vadd.f32 0.0, %v622
  %v624 = vpop.f32.mrf.mxu0
  %625 = vmatprep.mubr.f32.mxu0 0.0
  %626 = vmatmul.mubr.f32.gmra.mxu0 %v470
  %v627 = vpop.f32.mrf.mxu0
  %v628 = vadd.f32 0.0, %v627
  %v629 = vpop.f32.mrf.mxu0
  %630 = vmatprep.mubr.f32.mxu0 0.0
  %631 = vmatmul.mubr.f32.gmra.mxu0 %v473
  %v632 = vpop.f32.mrf.mxu0
  %v633 = vadd.f32 0.0, %v632
  %v634 = vpop.f32.mrf.mxu0
  %635 = vmatprep.mubr.f32.mxu0 0.0
  %636 = vmatmul.mubr.f32.gmra.mxu0 %v476
  %v637 = vpop.f32.mrf.mxu0
  %v638 = vadd.f32 0.0, %v637
  %v639 = vpop.f32.mrf.mxu0
  %640 = vmatprep.mubr.f32.mxu0 0.0
  %641 = vmatmul.mubr.f32.gmra.mxu0 %v479
  %v642 = vpop.f32.mrf.mxu0
  %v643 = vadd.f32 0.0, %v642
  %v644 = vpop.f32.mrf.mxu0
  %645 = vmatprep.mubr.f32.mxu0 0.0
  %646 = vmatmul.mubr.f32.gmra.mxu0 %v482
  %v647 = vpop.f32.mrf.mxu0
  %v648 = vadd.f32 0.0, %v647
  %v649 = vpop.f32.mrf.mxu0
  %650 = vmatprep.mubr.f32.mxu0 0.0
  %651 = vmatmul.mubr.f32.gmra.mxu0 %v485
  %v652 = vpop.f32.mrf.mxu0
  %v653 = vadd.f32 0.0, %v652
  %v654 = vpop.f32.mrf.mxu0
  %655 = vmatprep.mubr.f32.mxu0 0.0
  %656 = vmatmul.mubr.f32.gmra.mxu0 %v488
  %v657 = vpop.f32.mrf.mxu0
  %v658 = vadd.f32 0.0, %v657
  %v659 = vpop.f32.mrf.mxu0
  %660 = vmatprep.mubr.f32.mxu0 0.0
  %661 = vmatmul.mubr.f32.gmra.mxu0 %v491
  %v662 = vpop.f32.mrf.mxu0
  %v663 = vadd.f32 0.0, %v662
  %v664 = vpop.f32.mrf.mxu0
  %665 = vmatprep.mubr.f32.mxu0 0.0
  %666 = vmatmul.mubr.f32.gmra.mxu0 %v494
  %v667 = vpop.f32.mrf.mxu0
  %v668 = vadd.f32 0.0, %v667
  %v669 = vpop.f32.mrf.mxu0
  %670 = vmatprep.mubr.f32.mxu0 0.0
  %671 = vmatmul.mubr.f32.gmra.mxu0 %v497
  %v672 = vpop.f32.mrf.mxu0
  %v673 = vadd.f32 0.0, %v672
  %v674 = vpop.f32.mrf.mxu0
  %675 = vmatprep.mubr.f32.mxu0 0.0
  %676 = vmatmul.mubr.f32.gmra.mxu0 %v500
  %v677 = vpop.f32.mrf.mxu0
  %v678 = vadd.f32 0.0, %v677
  %v679 = vpop.f32.mrf.mxu0
  %680 = vmatprep.mubr.f32.mxu0 0.0
  %681 = vmatmul.mubr.f32.gmra.mxu0 %v503
  %v682 = vpop.f32.mrf.mxu0
  %v683 = vadd.f32 0.0, %v682
  %v684 = vpop.f32.mrf.mxu0
  %685 = vmatprep.mubr.f32.mxu0 0.0
  %686 = vmatmul.mubr.f32.gmra.mxu0 %v506
  %v687 = vpop.f32.mrf.mxu0
  %v688 = vadd.f32 0.0, %v687
  %v689 = vpop.f32.mrf.mxu0
  %690 = vmatprep.mubr.f32.mxu0 0.0
  %691 = vmatmul.mubr.f32.gmra.mxu0 %v509
  %v692 = vpop.f32.mrf.mxu0
  %v693 = vadd.f32 0.0, %v692
  %v694 = vpop.f32.mrf.mxu0
  %695 = vmatprep.mubr.f32.mxu0 0.0
  %696 = vmatmul.mubr.f32.gmra.mxu0 %v512
  %v697 = vpop.f32.mrf.mxu0
  %v698 = vadd.f32 0.0, %v697
  %v699 = vpop.f32.mrf.mxu0
  %700 = vmatprep.mubr.f32.mxu0 0.0
  %701 = vmatmul.mubr.f32.gmra.mxu0 %v515
  %v702 = vpop.f32.mrf.mxu0
  %v703 = vadd.f32 0.0, %v702
  %v704 = vpop.f32.mrf.mxu0
  %705 = vmatprep.mubr.f32.mxu0 0.0
  %706 = vmatmul.mubr.f32.gmra.mxu0 %v518
  %v707 = vpop.f32.mrf.mxu0
  %v708 = vadd.f32 0.0, %v707
  %v709 = vpop.f32.mrf.mxu0
  %710 = vmatprep.mubr.f32.mxu0 0.0
  %711 = vmatmul.mubr.f32.gmra.mxu0 %v521
  %v712 = vpop.f32.mrf.mxu0
  %v713 = vadd.f32 0.0, %v712
  %v714 = vpop.f32.mrf.mxu0
  %715 = vmatprep.mubr.f32.mxu0 0.0
  %716 = vmatmul.mubr.f32.gmra.mxu0 %v524
  %v717 = vpop.f32.mrf.mxu0
  %v718 = vadd.f32 0.0, %v717
  %v719 = vpop.f32.mrf.mxu0
  %720 = vmatprep.mubr.f32.mxu0 0.0
  %721 = vmatmul.mubr.f32.gmra.mxu0 %v527
  %v722 = vpop.f32.mrf.mxu0
  %v723 = vadd.f32 0.0, %v722
  %v724 = vpop.f32.mrf.mxu0
  %725 = vmatprep.mubr.f32.mxu0 0.0
  %726 = vmatmul.mubr.f32.gmra.mxu0 %v530
  %v727 = vpop.f32.mrf.mxu0
  %v728 = vadd.f32 0.0, %v727
  %v729 = vpop.f32.mrf.mxu0
  %730 = vmatprep.mubr.f32.mxu0 0.0
  %731 = vmatmul.mubr.f32.gmra.mxu0 %v533
  %v732 = vpop.f32.mrf.mxu0
  %v733 = vadd.f32 0.0, %v732
  %v734 = vpop.f32.mrf.mxu0
  %735 = vmatprep.mubr.f32.mxu0 0.0
  %736 = vmatmul.mubr.f32.gmra.mxu0 %v536
  %v737 = vpop.f32.mrf.mxu0
  %v738 = vadd.f32 0.0, %v737
  %v739 = vpop.f32.mrf.mxu0
  %740 = vmatprep.mubr.f32.mxu0 0.0
  %741 = vmatmul.mubr.f32.gmra.mxu0 %v539
  %v742 = vpop.f32.mrf.mxu0
  %v743 = vadd.f32 0.0, %v742
  %v744 = vpop.f32.mrf.mxu0
  %745 = vmatprep.mubr.f32.mxu0 0.0
  %746 = vmatmul.mubr.f32.gmra.mxu0 %v542
  %v747 = vpop.f32.mrf.mxu0
  %v748 = vadd.f32 0.0, %v747
  %v749 = vpop.f32.mrf.mxu0
  %750 = vmatprep.mubr.f32.mxu0 0.0
  %751 = vmatmul.mubr.f32.gmra.mxu0 %v545
  %v752 = vpop.f32.mrf.mxu0
  %v753 = vadd.f32 0.0, %v752
  %v754 = vpop.f32.mrf.mxu0
  %755 = vmatprep.mubr.f32.mxu0 0.0
  %756 = vmatmul.mubr.f32.gmra.mxu0 %v548
  %v757 = vpop.f32.mrf.mxu0
  %v758 = vadd.f32 0.0, %v757
  %v759 = vpop.f32.mrf.mxu0
  %760 = vmatprep.mubr.f32.mxu0 0.0
  %761 = vmatmul.mubr.f32.gmra.mxu0 %v551
  %v762 = vpop.f32.mrf.mxu0
  %v763 = vadd.f32 0.0, %v762
  %v764 = vpop.f32.mrf.mxu0
  %765 = vmatprep.mubr.f32.mxu0 0.0
  %766 = vmatmul.mubr.f32.gmra.mxu0 %v554
  %v767 = vpop.f32.mrf.mxu0
  %v768 = vadd.f32 0.0, %v767
  %v769 = vpop.f32.mrf.mxu0
  %770 = vdwg.mxu0
  %vm771 = vcmask 269312
  %772 = vst.msk [vmem:[#allocation2] sm:$0xff] %vm771, %v623
  %773 = vst.msk [vmem:[#allocation2 + $0x8] sm:$0xff] %vm771, %v628
  %774 = vst.msk [vmem:[#allocation2 + $0x10] sm:$0xff] %vm771, %v633
  %775 = vst.msk [vmem:[#allocation2 + $0x18] sm:$0xff] %vm771, %v638
  %776 = vst.msk [vmem:[#allocation2 + $0x20] sm:$0xff] %vm771, %v643
  %777 = vst.msk [vmem:[#allocation2 + $0x28] sm:$0xff] %vm771, %v648
  %778 = vst.msk [vmem:[#allocation2 + $0x30] sm:$0xff] %vm771, %v653
  %779 = vst.msk [vmem:[#allocation2 + $0x38] sm:$0xff] %vm771, %v658
  %780 = vst.msk [vmem:[#allocation2 + $0x40] sm:$0xff] %vm771, %v663
  %781 = vst.msk [vmem:[#allocation2 + $0x48] sm:$0xff] %vm771, %v668
  %782 = vst.msk [vmem:[#allocation2 + $0x50] sm:$0xff] %vm771, %v673
  %783 = vst.msk [vmem:[#allocation2 + $0x58] sm:$0xff] %vm771, %v678
  %784 = vst.msk [vmem:[#allocation2 + $0x60] sm:$0xff] %vm771, %v683
  %785 = vst.msk [vmem:[#allocation2 + $0x68] sm:$0xff] %vm771, %v688
  %786 = vst.msk [vmem:[#allocation2 + $0x70] sm:$0xff] %vm771, %v693
  %787 = vst.msk [vmem:[#allocation2 + $0x78] sm:$0xff] %vm771, %v698
  %788 = vst.msk [vmem:[#allocation2 + $0x80] sm:$0xff] %vm771, %v703
  %789 = vst.msk [vmem:[#allocation2 + $0x88] sm:$0xff] %vm771, %v708
  %790 = vst.msk [vmem:[#allocation2 + $0x90] sm:$0xff] %vm771, %v713
  %791 = vst.msk [vmem:[#allocation2 + $0x98] sm:$0xff] %vm771, %v718
  %792 = vst.msk [vmem:[#allocation2 + $0xa0] sm:$0xff] %vm771, %v723
  %793 = vst.msk [vmem:[#allocation2 + $0xa8] sm:$0xff] %vm771, %v728
  %794 = vst.msk [vmem:[#allocation2 + $0xb0] sm:$0xff] %vm771, %v733
  %795 = vst.msk [vmem:[#allocation2 + $0xb8] sm:$0xff] %vm771, %v738
  %796 = vst.msk [vmem:[#allocation2 + $0xc0] sm:$0xff] %vm771, %v743
  %797 = vst.msk [vmem:[#allocation2 + $0xc8] sm:$0xff] %vm771, %v748
  %798 = vst.msk [vmem:[#allocation2 + $0xd0] sm:$0xff] %vm771, %v753
  %799 = vst.msk [vmem:[#allocation2 + $0xd8] sm:$0xff] %vm771, %v758
  %800 = vst.msk [vmem:[#allocation2 + $0xe0] sm:$0xff] %vm771, %v763
  %801 = vst.msk [vmem:[#allocation2 + $0xe8] sm:$0xff] %vm771, %v768
  %v802 = vld [vmem:[#allocation2] sm:$0xff]
  %v803 = vld [vmem:[#allocation2 + $0x8] sm:$0xff]
  %v804 = vld [vmem:[#allocation2 + $0x10] sm:$0xff]
  %v805 = vld [vmem:[#allocation2 + $0x18] sm:$0xff]
  %v806 = vld [vmem:[#allocation2 + $0x20] sm:$0xff]
  %v807 = vmax.f32 %v802, %v803
  %v808 = vmax.f32 %v807, %v804
  %v809 = vmax.f32 %v808, %v805
  %v810 = vmax.f32 %v809, %v806
  %v811 = vsub.f32 %v802, %v810
  %v812 = vmul.f32 %v811, 1.442695
  %v813 = vpow.pop %v812
  %v814 = vsub.f32 %v803, %v810
  %v815 = vmul.f32 %v814, 1.442695
  %v816 = vpow.pop %v815
  %v817 = vsub.f32 %v804, %v810
  %v818 = vmul.f32 %v817, 1.442695
  %v819 = vpow.pop %v818
  %v820 = vsub.f32 %v805, %v810
  %v821 = vmul.f32 %v820, 1.442695
  %v822 = vpow.pop %v821
  %v823 = vsub.f32 %v806, %v810
  %v824 = vmul.f32 %v823, 1.442695
  %v825 = vpow.pop %v824
  %v826 = vadd.f32 %v813, %v816
  %v827 = vadd.f32 %v826, %v819
  %v828 = vadd.f32 %v827, %v822
  %v829 = vadd.f32 %v828, %v825
  %831 = vset.pattern.permute.xlu0 32
  %832 = vperm.xlu0 %831, %v813
  %v833 = vpop.permute.xlu0 %832
  %v835 = vmul.f32 %v833, %v802
  %837 = vset.pattern.permute.xlu0 32
  %838 = vperm.xlu0 %837, %v816
  %v839 = vpop.permute.xlu0 %838
  %v841 = vmul.f32 %v839, %v803
  %v842 = vadd.f32 %v835, %v841
  %844 = vset.pattern.permute.xlu0 32
  %845 = vperm.xlu0 %844, %v819
  %v846 = vpop.permute.xlu0 %845
  %v848 = vmul.f32 %v846, %v804
  %v849 = vadd.f32 %v842, %v848
  %851 = vset.pattern.permute.xlu0 32
  %852 = vperm.xlu0 %851, %v822
  %v853 = vpop.permute.xlu0 %852
  %v855 = vmul.f32 %v853, %v805
  %v856 = vadd.f32 %v849, %v855
  %858 = vset.pattern.permute.xlu0 32
  %859 = vperm.xlu0 %858, %v825
  %v860 = vpop.permute.xlu0 %859
  %v862 = vmul.f32 %v860, %v806
  %v863 = vadd.f32 %v856, %v862
  %865 = vset.pattern.permute.xlu0 32
  %866 = vperm.xlu0 %865, %v829
  %v867 = vpop.permute.xlu0 %866
  %v869 = vrcp.pop %v867
  %v870 = vmul.f32 %v863, %v869
  %v871 = vld [vmem:[#allocation2 + $0x28] sm:$0xff]
  %v872 = vld [vmem:[#allocation2 + $0x30] sm:$0xff]
  %v873 = vld [vmem:[#allocation2 + $0x38] sm:$0xff]
  %v874 = vld [vmem:[#allocation2 + $0x40] sm:$0xff]
  %v875 = vld [vmem:[#allocation2 + $0x48] sm:$0xff]
  %v876 = vld [vmem:[#allocation2 + $0x50] sm:$0xff]
  %v877 = vld [vmem:[#allocation2 + $0x58] sm:$0xff]
  %v878 = vld [vmem:[#allocation2 + $0x60] sm:$0xff]
  %v879 = vld [vmem:[#allocation2 + $0x68] sm:$0xff]
  %v880 = vld [vmem:[#allocation2 + $0x70] sm:$0xff]
  %v881 = vmax.f32 %v871, %v876
  %v882 = vmax.f32 %v872, %v877
  %v883 = vmax.f32 %v873, %v878
  %v884 = vmax.f32 %v874, %v879
  %v885 = vmax.f32 %v875, %v880
  %v886 = vsub.f32 %v871, %v881
  %v887 = vsub.f32 %v872, %v882
  %v888 = vsub.f32 %v873, %v883
  %v889 = vsub.f32 %v874, %v884
  %v890 = vsub.f32 %v875, %v885
  %v891 = vmul.f32 %v886, 1.442695
  %v892 = vpow.pop %v891
  %v893 = vmul.f32 %v887, 1.442695
  %v894 = vpow.pop %v893
  %v895 = vmul.f32 %v888, 1.442695
  %v896 = vpow.pop %v895
  %v897 = vmul.f32 %v889, 1.442695
  %v898 = vpow.pop %v897
  %v899 = vmul.f32 %v890, 1.442695
  %v900 = vpow.pop %v899
  %v901 = vsub.f32 %v876, %v881
  %v902 = vsub.f32 %v877, %v882
  %v903 = vsub.f32 %v878, %v883
  %v904 = vsub.f32 %v879, %v884
  %v905 = vsub.f32 %v880, %v885
  %v906 = vmul.f32 %v901, 1.442695
  %v907 = vpow.pop %v906
  %v908 = vmul.f32 %v902, 1.442695
  %v909 = vpow.pop %v908
  %v910 = vmul.f32 %v903, 1.442695
  %v911 = vpow.pop %v910
  %v912 = vmul.f32 %v904, 1.442695
  %v913 = vpow.pop %v912
  %v914 = vmul.f32 %v905, 1.442695
  %v915 = vpow.pop %v914
  %v916 = vadd.f32 %v892, %v907
  %v917 = vadd.f32 %v894, %v909
  %v918 = vadd.f32 %v896, %v911
  %v919 = vadd.f32 %v898, %v913
  %v920 = vadd.f32 %v900, %v915
  %922 = vset.pattern.permute.xlu0 32
  %923 = vperm.xlu0 %922, %v892
  %v924 = vpop.permute.xlu0 %923
  %927 = vset.pattern.permute.xlu0 32
  %928 = vperm.xlu0 %927, %v894
  %v929 = vpop.permute.xlu0 %928
  %932 = vset.pattern.permute.xlu0 32
  %933 = vperm.xlu0 %932, %v896
  %v934 = vpop.permute.xlu0 %933
  %937 = vset.pattern.permute.xlu0 32
  %938 = vperm.xlu0 %937, %v898
  %v939 = vpop.permute.xlu0 %938
  %942 = vset.pattern.permute.xlu0 32
  %943 = vperm.xlu0 %942, %v900
  %v944 = vpop.permute.xlu0 %943
  %v946 = vmul.f32 %v924, %v871
  %v947 = vmul.f32 %v929, %v872
  %v948 = vmul.f32 %v934, %v873
  %v949 = vmul.f32 %v939, %v874
  %v950 = vmul.f32 %v944, %v875
  %952 = vset.pattern.permute.xlu0 32
  %953 = vperm.xlu0 %952, %v907
  %v954 = vpop.permute.xlu0 %953
  %957 = vset.pattern.permute.xlu0 32
  %958 = vperm.xlu0 %957, %v909
  %v959 = vpop.permute.xlu0 %958
  %962 = vset.pattern.permute.xlu0 32
  %963 = vperm.xlu0 %962, %v911
  %v964 = vpop.permute.xlu0 %963
  %967 = vset.pattern.permute.xlu0 32
  %968 = vperm.xlu0 %967, %v913
  %v969 = vpop.permute.xlu0 %968
  %972 = vset.pattern.permute.xlu0 32
  %973 = vperm.xlu0 %972, %v915
  %v974 = vpop.permute.xlu0 %973
  %v976 = vmul.f32 %v954, %v876
  %v977 = vmul.f32 %v959, %v877
  %v978 = vmul.f32 %v964, %v878
  %v979 = vmul.f32 %v969, %v879
  %v980 = vmul.f32 %v974, %v880
  %v981 = vadd.f32 %v946, %v976
  %v982 = vadd.f32 %v947, %v977
  %v983 = vadd.f32 %v948, %v978
  %v984 = vadd.f32 %v949, %v979
  %v985 = vadd.f32 %v950, %v980
  %987 = vset.pattern.permute.xlu0 32
  %988 = vperm.xlu0 %987, %v916
  %v989 = vpop.permute.xlu0 %988
  %992 = vset.pattern.permute.xlu0 32
  %993 = vperm.xlu0 %992, %v917
  %v994 = vpop.permute.xlu0 %993
  %997 = vset.pattern.permute.xlu0 32
  %998 = vperm.xlu0 %997, %v918
  %v999 = vpop.permute.xlu0 %998
  %1002 = vset.pattern.permute.xlu0 32
  %1003 = vperm.xlu0 %1002, %v919
  %v1004 = vpop.permute.xlu0 %1003
  %1007 = vset.pattern.permute.xlu0 32
  %1008 = vperm.xlu0 %1007, %v920
  %v1009 = vpop.permute.xlu0 %1008
  %v1011 = vrcp.pop %v989
  %v1012 = vmul.f32 %v981, %v1011
  %v1013 = vrcp.pop %v994
  %v1014 = vmul.f32 %v982, %v1013
  %v1015 = vrcp.pop %v999
  %v1016 = vmul.f32 %v983, %v1015
  %v1017 = vrcp.pop %v1004
  %v1018 = vmul.f32 %v984, %v1017
  %v1019 = vrcp.pop %v1009
  %v1020 = vmul.f32 %v985, %v1019
  %v1021 = vadd.f32 %v870, 0.0
  %v1022 = vadd.f32 %v1012, 0.0
  %v1023 = vadd.f32 %v1014, 0.0
  %v1024 = vadd.f32 %v1016, 0.0
  %v1025 = vadd.f32 %v1018, 0.0
  %v1026 = vadd.f32 %v1020, 0.0
  %vm1027 = vcmp.ge.f32.partialorder %v1021, 1.0
  %vm1028 = vcmp.ge.f32.partialorder %v1022, 1.0
  %vm1029 = vcmp.ge.f32.partialorder %v1023, 1.0
  %vm1030 = vcmp.ge.f32.partialorder %v1024, 1.0
  %vm1031 = vcmp.ge.f32.partialorder %v1025, 1.0
  %vm1032 = vcmp.ge.f32.partialorder %v1026, 1.0
  %v1033 = vsel %vm1027, 1, 0
  %v1034 = vsel %vm1028, 1, 0
  %v1035 = vsel %vm1029, 1, 0
  %v1036 = vsel %vm1030, 1, 0
  %v1037 = vsel %vm1031, 1, 0
  %v1038 = vsel %vm1032, 1, 0
  %v1039 = vcvt.s32.f32 %v1033
  %v1040 = vcvt.s32.f32 %v1034
  %v1041 = vcvt.s32.f32 %v1035
  %v1042 = vcvt.s32.f32 %v1036
  %v1043 = vcvt.s32.f32 %v1037
  %v1044 = vcvt.s32.f32 %v1038
  %v1045 = vsub.f32 1.0, %v1039
  %v1046 = vsub.f32 1.0, %v1040
  %v1047 = vsub.f32 1.0, %v1041
  %v1048 = vsub.f32 1.0, %v1042
  %v1049 = vsub.f32 1.0, %v1043
  %v1050 = vsub.f32 1.0, %v1044
  %v1051 = vmul.f32 %v1021, %v1045
  %v1052 = vmul.f32 %v1022, %v1046
  %v1053 = vmul.f32 %v1023, %v1047
  %v1054 = vmul.f32 %v1024, %v1048
  %v1055 = vmul.f32 %v1025, %v1049
  %v1056 = vmul.f32 %v1026, %v1050
  %v1057 = vld [vmem:[%s3] sm:$0xff]
  %v1058 = vld [vmem:[%s3 + $0x8] sm:$0xff]
  %v1059 = vld [vmem:[%s3 + $0x10] sm:$0xff]
  %v1060 = vld [vmem:[%s3 + $0x18] sm:$0xff]
  %v1061 = vld [vmem:[#allocation2 + $0x78] sm:$0xff]
  %v1062 = vld [vmem:[#allocation2 + $0x80] sm:$0xff]
  %v1063 = vld [vmem:[#allocation2 + $0x88] sm:$0xff]
  %v1064 = vld [vmem:[#allocation2 + $0x90] sm:$0xff]
  %v1065 = vld [vmem:[#allocation2 + $0x98] sm:$0xff]
  %v1066 = vmax.f32 %v1061, %v1062
  %v1067 = vmax.f32 %v1066, %v1063
  %v1068 = vmax.f32 %v1067, %v1064
  %v1069 = vmax.f32 %v1068, %v1065
  %v1070 = vsub.f32 %v1061, %v1069
  %v1071 = vmul.f32 %v1070, 1.442695
  %v1072 = vpow.pop %v1071
  %v1073 = vsub.f32 %v1062, %v1069
  %v1074 = vmul.f32 %v1073, 1.442695
  %v1075 = vpow.pop %v1074
  %v1076 = vsub.f32 %v1063, %v1069
  %v1077 = vmul.f32 %v1076, 1.442695
  %v1078 = vpow.pop %v1077
  %v1079 = vsub.f32 %v1064, %v1069
  %v1080 = vmul.f32 %v1079, 1.442695
  %v1081 = vpow.pop %v1080
  %v1082 = vsub.f32 %v1065, %v1069
  %v1083 = vmul.f32 %v1082, 1.442695
  %v1084 = vpow.pop %v1083
  %v1085 = vadd.f32 %v1072, %v1075
  %v1086 = vadd.f32 %v1085, %v1078
  %v1087 = vadd.f32 %v1086, %v1081
  %v1088 = vadd.f32 %v1087, %v1084
  %1090 = vset.pattern.permute.xlu0 32
  %1091 = vperm.xlu0 %1090, %v1072
  %v1092 = vpop.permute.xlu0 %1091
  %v1094 = vmul.f32 %v1092, %v1061
  %1096 = vset.pattern.permute.xlu0 32
  %1097 = vperm.xlu0 %1096, %v1075
  %v1098 = vpop.permute.xlu0 %1097
  %v1100 = vmul.f32 %v1098, %v1062
  %v1101 = vadd.f32 %v1094, %v1100
  %1103 = vset.pattern.permute.xlu0 32
  %1104 = vperm.xlu0 %1103, %v1078
  %v1105 = vpop.permute.xlu0 %1104
  %v1107 = vmul.f32 %v1105, %v1063
  %v1108 = vadd.f32 %v1101, %v1107
  %1110 = vset.pattern.permute.xlu0 32
  %1111 = vperm.xlu0 %1110, %v1081
  %v1112 = vpop.permute.xlu0 %1111
  %v1114 = vmul.f32 %v1112, %v1064
  %v1115 = vadd.f32 %v1108, %v1114
  %1117 = vset.pattern.permute.xlu0 32
  %1118 = vperm.xlu0 %1117, %v1084
  %v1119 = vpop.permute.xlu0 %1118
  %v1121 = vmul.f32 %v1119, %v1065
  %v1122 = vadd.f32 %v1115, %v1121
  %1124 = vset.pattern.permute.xlu0 32
  %1125 = vperm.xlu0 %1124, %v1088
  %v1126 = vpop.permute.xlu0 %1125
  %v1128 = vrcp.pop %v1126
  %v1129 = vmul.f32 %v1122, %v1128
  %v1130 = vld [vmem:[#allocation2 + $0xa0] sm:$0xff]
  %v1131 = vld [vmem:[#allocation2 + $0xa8] sm:$0xff]
  %v1132 = vld [vmem:[#allocation2 + $0xb0] sm:$0xff]
  %v1133 = vld [vmem:[#allocation2 + $0xb8] sm:$0xff]
  %v1134 = vld [vmem:[#allocation2 + $0xc0] sm:$0xff]
  %v1135 = vld [vmem:[#allocation2 + $0xc8] sm:$0xff]
  %v1136 = vld [vmem:[#allocation2 + $0xd0] sm:$0xff]
  %v1137 = vld [vmem:[#allocation2 + $0xd8] sm:$0xff]
  %v1138 = vld [vmem:[#allocation2 + $0xe0] sm:$0xff]
  %v1139 = vld [vmem:[#allocation2 + $0xe8] sm:$0xff]
  %v1140 = vmax.f32 %v1130, %v1135
  %v1141 = vmax.f32 %v1131, %v1136
  %v1142 = vmax.f32 %v1132, %v1137
  %v1143 = vmax.f32 %v1133, %v1138
  %v1144 = vmax.f32 %v1134, %v1139
  %v1145 = vsub.f32 %v1130, %v1140
  %v1146 = vsub.f32 %v1131, %v1141
  %v1147 = vsub.f32 %v1132, %v1142
  %v1148 = vsub.f32 %v1133, %v1143
  %v1149 = vsub.f32 %v1134, %v1144
  %v1150 = vmul.f32 %v1145, 1.442695
  %v1151 = vpow.pop %v1150
  %v1152 = vmul.f32 %v1146, 1.442695
  %v1153 = vpow.pop %v1152
  %v1154 = vmul.f32 %v1147, 1.442695
  %v1155 = vpow.pop %v1154
  %v1156 = vmul.f32 %v1148, 1.442695
  %v1157 = vpow.pop %v1156
  %v1158 = vmul.f32 %v1149, 1.442695
  %v1159 = vpow.pop %v1158
  %v1160 = vsub.f32 %v1135, %v1140
  %v1161 = vsub.f32 %v1136, %v1141
  %v1162 = vsub.f32 %v1137, %v1142
  %v1163 = vsub.f32 %v1138, %v1143
  %v1164 = vsub.f32 %v1139, %v1144
  %v1165 = vmul.f32 %v1160, 1.442695
  %v1166 = vpow.pop %v1165
  %v1167 = vmul.f32 %v1161, 1.442695
  %v1168 = vpow.pop %v1167
  %v1169 = vmul.f32 %v1162, 1.442695
  %v1170 = vpow.pop %v1169
  %v1171 = vmul.f32 %v1163, 1.442695
  %v1172 = vpow.pop %v1171
  %v1173 = vmul.f32 %v1164, 1.442695
  %v1174 = vpow.pop %v1173
  %v1175 = vadd.f32 %v1151, %v1166
  %v1176 = vadd.f32 %v1153, %v1168
  %v1177 = vadd.f32 %v1155, %v1170
  %v1178 = vadd.f32 %v1157, %v1172
  %v1179 = vadd.f32 %v1159, %v1174
  %1181 = vset.pattern.permute.xlu0 32
  %1182 = vperm.xlu0 %1181, %v1151
  %v1183 = vpop.permute.xlu0 %1182
  %1186 = vset.pattern.permute.xlu0 32
  %1187 = vperm.xlu0 %1186, %v1153
  %v1188 = vpop.permute.xlu0 %1187
  %1191 = vset.pattern.permute.xlu0 32
  %1192 = vperm.xlu0 %1191, %v1155
  %v1193 = vpop.permute.xlu0 %1192
  %1196 = vset.pattern.permute.xlu0 32
  %1197 = vperm.xlu0 %1196, %v1157
  %v1198 = vpop.permute.xlu0 %1197
  %1201 = vset.pattern.permute.xlu0 32
  %1202 = vperm.xlu0 %1201, %v1159
  %v1203 = vpop.permute.xlu0 %1202
  %v1205 = vmul.f32 %v1183, %v1130
  %v1206 = vmul.f32 %v1188, %v1131
  %v1207 = vmul.f32 %v1193, %v1132
  %v1208 = vmul.f32 %v1198, %v1133
  %v1209 = vmul.f32 %v1203, %v1134
  %1211 = vset.pattern.permute.xlu0 32
  %1212 = vperm.xlu0 %1211, %v1166
  %v1213 = vpop.permute.xlu0 %1212
  %1216 = vset.pattern.permute.xlu0 32
  %1217 = vperm.xlu0 %1216, %v1168
  %v1218 = vpop.permute.xlu0 %1217
  %1221 = vset.pattern.permute.xlu0 32
  %1222 = vperm.xlu0 %1221, %v1170
  %v1223 = vpop.permute.xlu0 %1222
  %1226 = vset.pattern.permute.xlu0 32
  %1227 = vperm.xlu0 %1226, %v1172
  %v1228 = vpop.permute.xlu0 %1227
  %1231 = vset.pattern.permute.xlu0 32
  %1232 = vperm.xlu0 %1231, %v1174
  %v1233 = vpop.permute.xlu0 %1232
  %v1235 = vmul.f32 %v1213, %v1135
  %v1236 = vmul.f32 %v1218, %v1136
  %v1237 = vmul.f32 %v1223, %v1137
  %v1238 = vmul.f32 %v1228, %v1138
  %v1239 = vmul.f32 %v1233, %v1139
  %v1240 = vadd.f32 %v1205, %v1235
  %v1241 = vadd.f32 %v1206, %v1236
  %v1242 = vadd.f32 %v1207, %v1237
  %v1243 = vadd.f32 %v1208, %v1238
  %v1244 = vadd.f32 %v1209, %v1239
  %1246 = vset.pattern.permute.xlu0 32
  %1247 = vperm.xlu0 %1246, %v1175
  %v1248 = vpop.permute.xlu0 %1247
  %1251 = vset.pattern.permute.xlu0 32
  %1252 = vperm.xlu0 %1251, %v1176
  %v1253 = vpop.permute.xlu0 %1252
  %1256 = vset.pattern.permute.xlu0 32
  %1257 = vperm.xlu0 %1256, %v1177
  %v1258 = vpop.permute.xlu0 %1257
  %1261 = vset.pattern.permute.xlu0 32
  %1262 = vperm.xlu0 %1261, %v1178
  %v1263 = vpop.permute.xlu0 %1262
  %1266 = vset.pattern.permute.xlu0 32
  %1267 = vperm.xlu0 %1266, %v1179
  %v1268 = vpop.permute.xlu0 %1267
  %v1270 = vrcp.pop %v1248
  %v1271 = vmul.f32 %v1240, %v1270
  %v1272 = vrcp.pop %v1253
  %v1273 = vmul.f32 %v1241, %v1272
  %v1274 = vrcp.pop %v1258
  %v1275 = vmul.f32 %v1242, %v1274
  %v1276 = vrcp.pop %v1263
  %v1277 = vmul.f32 %v1243, %v1276
  %v1278 = vrcp.pop %v1268
  %v1279 = vmul.f32 %v1244, %v1278
  %v1280 = vsub.f32 %v1129, %v1051
  %v1281 = vsub.f32 %v1271, %v1052
  %v1282 = vsub.f32 %v1273, %v1053
  %v1283 = vsub.f32 %v1275, %v1054
  %v1284 = vsub.f32 %v1277, %v1055
  %v1285 = vsub.f32 %v1279, %v1056
  %v1286 = vadd.f32 %v1051, %v1280
  %v1287 = vadd.f32 %v1052, %v1281
  %v1288 = vadd.f32 %v1053, %v1282
  %v1289 = vadd.f32 %v1054, %v1283
  %v1290 = vadd.f32 %v1055, %v1284
  %v1291 = vadd.f32 %v1056, %v1285
  %vm1292 = vcmp.ge.f32.partialorder %v1286, 1.0
  %vm1293 = vcmp.ge.f32.partialorder %v1287, 1.0
  %vm1294 = vcmp.ge.f32.partialorder %v1288, 1.0
  %vm1295 = vcmp.ge.f32.partialorder %v1289, 1.0
  %vm1296 = vcmp.ge.f32.partialorder %v1290, 1.0
  %vm1297 = vcmp.ge.f32.partialorder %v1291, 1.0
  %v1298 = vsel %vm1292, 1, 0
  %v1299 = vsel %vm1293, 1, 0
  %v1300 = vsel %vm1294, 1, 0
  %v1301 = vsel %vm1295, 1, 0
  %v1302 = vsel %vm1296, 1, 0
  %v1303 = vsel %vm1297, 1, 0
  %v1304 = vcvt.s32.f32 %v1298
  %v1305 = vcvt.s32.f32 %v1299
  %v1306 = vcvt.s32.f32 %v1300
  %v1307 = vcvt.s32.f32 %v1301
  %v1308 = vcvt.s32.f32 %v1302
  %v1309 = vcvt.s32.f32 %v1303
  %v1310 = vld [vmem:[%s3 + $0x20] sm:$0xff]
  %v1311 = vld [vmem:[%s3 + $0x28] sm:$0xff]
  %v1312 = vld [vmem:[%s3 + $0x30] sm:$0xff]
  %v1313 = vld [vmem:[%s3 + $0x38] sm:$0xff]
  %vm1314 = vcmask 261120
  %v1316 = vsel %vm1314, %v1304, 0
  %v1319 = vsel %vm1314, %v1305, 0
  %v1322 = vsel %vm1314, %v1306, 0
  %v1325 = vsel %vm1314, %v1307, 0
  %v1328 = vsel %vm1314, %v1308, 0
  %v1331 = vsel %vm1314, %v1309, 0
  %1333 = vmatprep.subr.mxu0 0.0
  %1334 = vmatpush1.msra.mxu0 0.0
  %1335 = vmatprep.subr.mxu0 0.0
  %1336 = vmatpush1.msra.mxu0 0.0
  %1337 = vmatprep.subr.mxu0 0.0
  %1338 = vmatpush1.msra.mxu0 0.0
  %1339 = vmatprep.subr.mxu0 0.0
  %1340 = vmatpush1.msra.mxu0 0.0
  %1341 = vmatprep.subr.mxu0 0.0
  %1342 = vmatpush1.msra.mxu0 0.0
  %1343 = vmatprep.subr.mxu0 0.0
  %1344 = vmatpush1.msra.mxu0 0.0
  %1345 = vmatprep.subr.mxu0 0.0
  %1346 = vmatpush1.msra.mxu0 0.0
  %1347 = vmatprep.subr.mxu0 0.0
  %1348 = vmatpush1.msra.mxu0 0.0
  %1349 = vmatprep.subr.mxu0 0.0
  %1350 = vmatpush1.msra.mxu0 0.0
  %1351 = vmatprep.subr.mxu0 0.0
  %1352 = vmatpush1.msra.mxu0 0.0
  %1353 = vmatprep.subr.mxu0 0.0
  %1354 = vmatpush1.msra.mxu0 0.0
  %1355 = vmatprep.subr.mxu0 0.0
  %1356 = vmatpush1.msra.mxu0 0.0
  %1357 = vmatprep.subr.mxu0 0.0
  %1358 = vmatpush1.msra.mxu0 %v1313
  %1359 = vmatprep.subr.mxu0 0.0
  %1360 = vmatpush1.msra.mxu0 %v1312
  %1361 = vmatprep.subr.mxu0 0.0
  %1362 = vmatpush1.msra.mxu0 %v1311
  %1363 = vmatprep.subr.mxu0 0.0
  %1364 = vmatpush1.msra.mxu0 %v1310
  %1365 = vmatprep.subr.mxu0 0.0
  %1366 = vmatpush2.msra.mxu0 0.0
  %1367 = vmatprep.subr.mxu0 0.0
  %1368 = vmatpush2.msra.mxu0 0.0
  %1369 = vmatprep.subr.mxu0 0.0
  %1370 = vmatpush2.msra.mxu0 0.0
  %1371 = vmatprep.subr.mxu0 0.0
  %1372 = vmatpush2.msra.mxu0 0.0
  %1373 = vmatprep.subr.mxu0 0.0
  %1374 = vmatpush2.msra.mxu0 0.0
  %1375 = vmatprep.subr.mxu0 0.0
  %1376 = vmatpush2.msra.mxu0 0.0
  %1377 = vmatprep.subr.mxu0 0.0
  %1378 = vmatpush2.msra.mxu0 0.0
  %1379 = vmatprep.subr.mxu0 0.0
  %1380 = vmatpush2.msra.mxu0 0.0
  %1381 = vmatprep.subr.mxu0 0.0
  %1382 = vmatpush2.msra.mxu0 0.0
  %1383 = vmatprep.subr.mxu0 0.0
  %1384 = vmatpush2.msra.mxu0 0.0
  %1385 = vmatprep.subr.mxu0 0.0
  %1386 = vmatpush2.msra.mxu0 0.0
  %1387 = vmatprep.subr.mxu0 0.0
  %1388 = vmatpush2.msra.mxu0 0.0
  %1389 = vmatprep.subr.mxu0 0.0
  %1390 = vmatpush2.msra.mxu0 0.0
  %1391 = vmatprep.subr.mxu0 0.0
  %1392 = vmatpush2.msra.mxu0 0.0
  %1393 = vmatprep.subr.mxu0 0.0
  %1394 = vmatpush2.msra.mxu0 0.0
  %1395 = vmatprep.subr.mxu0 0.0
  %1396 = vmatpush2.msra.mxu0 0.0
  %1397 = vmatprep.mubr.f32.mxu0 0.0
  %1398 = vmatmul.mubr.f32.gmra.mxu0 %v1316
  %v1399 = vpop.f32.mrf.mxu0
  %v1400 = vadd.f32 0.0, %v1399
  %v1401 = vpop.f32.mrf.mxu0
  %1402 = vmatprep.mubr.f32.mxu0 0.0
  %1403 = vmatmul.mubr.f32.gmra.mxu0 %v1319
  %v1404 = vpop.f32.mrf.mxu0
  %v1405 = vadd.f32 0.0, %v1404
  %v1406 = vpop.f32.mrf.mxu0
  %1407 = vmatprep.mubr.f32.mxu0 0.0
  %1408 = vmatmul.mubr.f32.gmra.mxu0 %v1322
  %v1409 = vpop.f32.mrf.mxu0
  %v1410 = vadd.f32 0.0, %v1409
  %v1411 = vpop.f32.mrf.mxu0
  %1412 = vmatprep.mubr.f32.mxu0 0.0
  %1413 = vmatmul.mubr.f32.gmra.mxu0 %v1325
  %v1414 = vpop.f32.mrf.mxu0
  %v1415 = vadd.f32 0.0, %v1414
  %v1416 = vpop.f32.mrf.mxu0
  %1417 = vmatprep.mubr.f32.mxu0 0.0
  %1418 = vmatmul.mubr.f32.gmra.mxu0 %v1328
  %v1419 = vpop.f32.mrf.mxu0
  %v1420 = vadd.f32 0.0, %v1419
  %v1421 = vpop.f32.mrf.mxu0
  %1422 = vmatprep.mubr.f32.mxu0 0.0
  %1423 = vmatmul.mubr.f32.gmra.mxu0 %v1331
  %v1424 = vpop.f32.mrf.mxu0
  %v1425 = vadd.f32 0.0, %v1424
  %v1426 = vpop.f32.mrf.mxu0
  %1427 = vdwg.mxu0
  %v1429 = vsel %vm1314, %v1039, 0
  %v1432 = vsel %vm1314, %v1040, 0
  %v1435 = vsel %vm1314, %v1041, 0
  %v1438 = vsel %vm1314, %v1042, 0
  %v1441 = vsel %vm1314, %v1043, 0
  %v1444 = vsel %vm1314, %v1044, 0
  %1446 = vmatprep.subr.mxu0 0.0
  %1447 = vmatpush1.msra.mxu0 0.0
  %1448 = vmatprep.subr.mxu0 0.0
  %1449 = vmatpush1.msra.mxu0 0.0
  %1450 = vmatprep.subr.mxu0 0.0
  %1451 = vmatpush1.msra.mxu0 0.0
  %1452 = vmatprep.subr.mxu0 0.0
  %1453 = vmatpush1.msra.mxu0 0.0
  %1454 = vmatprep.subr.mxu0 0.0
  %1455 = vmatpush1.msra.mxu0 0.0
  %1456 = vmatprep.subr.mxu0 0.0
  %1457 = vmatpush1.msra.mxu0 0.0
  %1458 = vmatprep.subr.mxu0 0.0
  %1459 = vmatpush1.msra.mxu0 0.0
  %1460 = vmatprep.subr.mxu0 0.0
  %1461 = vmatpush1.msra.mxu0 0.0
  %1462 = vmatprep.subr.mxu0 0.0
  %1463 = vmatpush1.msra.mxu0 0.0
  %1464 = vmatprep.subr.mxu0 0.0
  %1465 = vmatpush1.msra.mxu0 0.0
  %1466 = vmatprep.subr.mxu0 0.0
  %1467 = vmatpush1.msra.mxu0 0.0
  %1468 = vmatprep.subr.mxu0 0.0
  %1469 = vmatpush1.msra.mxu0 0.0
  %1470 = vmatprep.subr.mxu0 0.0
  %1471 = vmatpush1.msra.mxu0 %v1060
  %1472 = vmatprep.subr.mxu0 0.0
  %1473 = vmatpush1.msra.mxu0 %v1059
  %1474 = vmatprep.subr.mxu0 0.0
  %1475 = vmatpush1.msra.mxu0 %v1058
  %1476 = vmatprep.subr.mxu0 0.0
  %1477 = vmatpush1.msra.mxu0 %v1057
  %1478 = vmatprep.subr.mxu0 0.0
  %1479 = vmatpush2.msra.mxu0 0.0
  %1480 = vmatprep.subr.mxu0 0.0
  %1481 = vmatpush2.msra.mxu0 0.0
  %1482 = vmatprep.subr.mxu0 0.0
  %1483 = vmatpush2.msra.mxu0 0.0
  %1484 = vmatprep.subr.mxu0 0.0
  %1485 = vmatpush2.msra.mxu0 0.0
  %1486 = vmatprep.subr.mxu0 0.0
  %1487 = vmatpush2.msra.mxu0 0.0
  %1488 = vmatprep.subr.mxu0 0.0
  %1489 = vmatpush2.msra.mxu0 0.0
  %1490 = vmatprep.subr.mxu0 0.0
  %1491 = vmatpush2.msra.mxu0 0.0
  %1492 = vmatprep.subr.mxu0 0.0
  %1493 = vmatpush2.msra.mxu0 0.0
  %1494 = vmatprep.subr.mxu0 0.0
  %1495 = vmatpush2.msra.mxu0 0.0
  %1496 = vmatprep.subr.mxu0 0.0
  %1497 = vmatpush2.msra.mxu0 0.0
  %1498 = vmatprep.subr.mxu0 0.0
  %1499 = vmatpush2.msra.mxu0 0.0
  %1500 = vmatprep.subr.mxu0 0.0
  %1501 = vmatpush2.msra.mxu0 0.0
  %1502 = vmatprep.subr.mxu0 0.0
  %1503 = vmatpush2.msra.mxu0 0.0
  %1504 = vmatprep.subr.mxu0 0.0
  %1505 = vmatpush2.msra.mxu0 0.0
  %1506 = vmatprep.subr.mxu0 0.0
  %1507 = vmatpush2.msra.mxu0 0.0
  %1508 = vmatprep.subr.mxu0 0.0
  %1509 = vmatpush2.msra.mxu0 0.0
  %1510 = vmatprep.mubr.f32.mxu0 0.0
  %1511 = vmatmul.mubr.f32.gmra.mxu0 %v1429
  %v1512 = vpop.f32.mrf.mxu0
  %v1513 = vadd.f32 %v1400, %v1512
  %v1514 = vpop.f32.mrf.mxu0
  %1515 = vmatprep.mubr.f32.mxu0 0.0
  %1516 = vmatmul.mubr.f32.gmra.mxu0 %v1432
  %v1517 = vpop.f32.mrf.mxu0
  %v1518 = vadd.f32 %v1405, %v1517
  %v1519 = vpop.f32.mrf.mxu0
  %1520 = vmatprep.mubr.f32.mxu0 0.0
  %1521 = vmatmul.mubr.f32.gmra.mxu0 %v1435
  %v1522 = vpop.f32.mrf.mxu0
  %v1523 = vadd.f32 %v1410, %v1522
  %v1524 = vpop.f32.mrf.mxu0
  %1525 = vmatprep.mubr.f32.mxu0 0.0
  %1526 = vmatmul.mubr.f32.gmra.mxu0 %v1438
  %v1527 = vpop.f32.mrf.mxu0
  %v1528 = vadd.f32 %v1415, %v1527
  %v1529 = vpop.f32.mrf.mxu0
  %1530 = vmatprep.mubr.f32.mxu0 0.0
  %1531 = vmatmul.mubr.f32.gmra.mxu0 %v1441
  %v1532 = vpop.f32.mrf.mxu0
  %v1533 = vadd.f32 %v1420, %v1532
  %v1534 = vpop.f32.mrf.mxu0
  %1535 = vmatprep.mubr.f32.mxu0 0.0
  %1536 = vmatmul.mubr.f32.gmra.mxu0 %v1444
  %v1537 = vpop.f32.mrf.mxu0
  %v1538 = vadd.f32 %v1425, %v1537
  %v1539 = vpop.f32.mrf.mxu0
  %1540 = vdwg.mxu0
  %v1541 = vld [vmem:[%s4] sm:$0x1]
  %v1543 = vlaneseq
  %v1544 = vshrl.u32 %v1543, 7
  %v1545 = vsub.s32 0, %v1544
  %v1546 = vrot.slane %v1541, %v1545
  %v1548 = vadd.f32 %v1513, %v1546
  %v1549 = vadd.f32 %v1518, %v1546
  %v1550 = vadd.f32 %v1523, %v1546
  %v1551 = vadd.f32 %v1528, %v1546
  %v1552 = vadd.f32 %v1533, %v1546
  %v1553 = vadd.f32 %v1538, %v1546
  %vm1554 = vcmask 64512
  %1555 = vst.msk [vmem:[%s5] sm:$0xff] %vm1554, %v1548
  %1556 = vst.msk [vmem:[%s5 + $0x8] sm:$0xff] %vm1554, %v1549
  %1557 = vst.msk [vmem:[%s5 + $0x10] sm:$0xff] %vm1554, %v1550
  %1558 = vst.msk [vmem:[%s5 + $0x18] sm:$0xff] %vm1554, %v1551
  %1559 = vst.msk [vmem:[%s5 + $0x20] sm:$0xff] %vm1554, %v1552
  %1560 = vst.msk [vmem:[%s5 + $0x28] sm:$0xff] %vm1554, %v1553
  // Predicated region
  $region22: #{spikenet_forward.1} parent=0 // pred_check
    _
  $region23: #{spikenet_forward.1} parent=0 // pred_check_branch
    %1562 = sbr.rel (0) target = $region25
  $region24: #{spikenet_forward.1} parent=0 // pred_region
    _
  $region25: #{spikenet_forward.1} parent=0 // pred_fallthru
    _
  // Predicated region
  $region26: #{spikenet_forward.1} parent=0 // pred_check
    _
  $region27: #{spikenet_forward.1} parent=0 // pred_check_branch
    %1564 = sbr.rel (0) target = $region29
  $region28: #{spikenet_forward.1} parent=0 // pred_region
    _
  $region29: #{spikenet_forward.1} parent=0 // pred_fallthru
    _

</llo_original>
